<compile_context>
chip_gen: v7x
topology: tpu7x:2x2x1
jax: 0.10.0
libtpu: 0.0.40
codegen_flags: <defaults>
</compile_context>

<pallas_src>
import functools

import jax
import jax.numpy as jnp
from jax import lax
from jax.experimental import pallas as pl
from jax.experimental.pallas import tpu as pltpu


# ----------------------------------------------------------------------------
# Fused kernel: one grid step per block of `block_b` batch elements.
#   qkv  = x @ Wqkv + bqkv         (Wq/bq pre-scaled by qkv_dim^-0.5, bf16 MXU)
#   per batch b, head h: s = q k^T ; p = softmax(s) ; y_b += (p v) @ Wo_h
#   store y_b + bo as lane-dense (S, E) rows
# ----------------------------------------------------------------------------
def _mhsa_kernel(x_ref, wqkv_ref, bqkv_ref, wo_ref, bo_ref, o_ref,
                 *, n_heads, qkv_dim, block_b, seq_len):
    D, S, H = qkv_dim, seq_len, n_heads
    E = wo_ref.shape[-1]

    x = x_ref[...]                                   # (M, E)   bf16, M=block_b*S
    wqkv = wqkv_ref[...]                             # (E, 3HD) bf16
    wo = wo_ref[...]                                 # (HD, E)  bf16
    bqkv = bqkv_ref[...]                             # (1, 3HD) f32
    bo = bo_ref[...]                                 # (1, E)   f32

    # One fused QKV projection for every token in the block (M rows on the MXU
    # instead of S); f32 accumulation and f32 bias add.
    qkv = jnp.dot(x, wqkv, preferred_element_type=jnp.float32) + bqkv   # (M, 3HD)

    for b in range(block_b):                         # static, fully unrolled
        r0 = b * S
        qkv_b = qkv[r0:r0 + S]                       # (S, 3HD) sublane slice
        y_b = jnp.zeros((S, E), jnp.float32)

        for h in range(H):                           # static, fully unrolled
            # Per-head [q|k|v] is contiguous: a single 3D-wide lane slice.
            blk = qkv_b[:, h * 3 * D:(h + 1) * 3 * D]            # (S, 3D) f32
            q = blk[:, :D].astype(jnp.bfloat16)                  # scale pre-folded
            k = blk[:, D:2 * D].astype(jnp.bfloat16)
            v = blk[:, 2 * D:].astype(jnp.bfloat16)

            # q @ k^T via contracting-dim spec (no XLU transpose), f32 scores.
            s = lax.dot_general(q, k, (((1,), (1,)), ((), ())),
                                preferred_element_type=jnp.float32)   # (S, S)
            # Softmax entirely in f32 (VPU/EUP); denom on the EUP slot.
            s = s - jnp.max(s, axis=-1, keepdims=True)
            p = jnp.exp(s)
            p = p * pl.reciprocal(jnp.sum(p, axis=-1, keepdims=True), approx=True)
            # TODO(synk): attention-weight dropout goes here in training mode.

            o_h = jnp.dot(p.astype(jnp.bfloat16), v,
                          preferred_element_type=jnp.float32)         # (S, D)

            # Output projection accumulated per head: no lane-axis concat.
            wo_h = wo[h * D:(h + 1) * D, :]                           # (D, E) bf16
            y_b = y_b + jnp.dot(o_h.astype(jnp.bfloat16), wo_h,
                                preferred_element_type=jnp.float32)   # (S, E)

        # Single lane-dense (S, E) store per batch element of the block.
        o_ref[r0:r0 + S, :] = (y_b + bo).astype(o_ref.dtype)


def _pick_block_b(batch, seq_len, target_m=128):
    """Largest divisor of `batch` such that block_b*seq_len stays <= ~target_m
    (and row-blocks stay sublane aligned when the grid has >1 step)."""
    best = 1
    for d in range(1, batch + 1):
        if batch % d != 0:
            continue
        if d * seq_len > max(target_m, seq_len):
            continue
        if d != batch and (d * seq_len) % 8 != 0:
            continue
        best = d
    return best


def multi_head_self_attention(x, params, *, block_b=None):
    """x: (B, S, E) -> (B, S, E); matches MultiHeadSelfAttention.forward (eval).

    params = (wq, bq, wk, bk, wv, bv, wo, bo) with
      wq/wk/wv: (H, E, D), bq/bk/bv: (H, 1, D), wo: (H*D, E), bo: (1, E).
    """
    wq, bq, wk, bk, wv, bv, wo, bo = params
    B, S, E = x.shape
    H, _, D = wq.shape
    HD = H * D
    scale = float(D) ** -0.5

    # --- Trace-time weight packing (all in f32, scale folded before casts) ---
    # Columns of W_qkv for head h are [ Wq_h*scale | Wk_h | Wv_h ] contiguous.
    w_per_head = jnp.concatenate([wq * scale, wk, wv], axis=-1)       # (H, E, 3D)
    w_qkv = jnp.transpose(w_per_head, (1, 0, 2)).reshape(E, 3 * HD)   # (E, 3HD)
    b_per_head = jnp.concatenate([bq * scale, bk, bv], axis=-1)       # (H, 1, 3D)
    b_qkv = b_per_head.reshape(1, 3 * HD).astype(jnp.float32)         # (1, 3HD)

    # bf16 MXU operands; biases and accumulators stay f32.
    x2 = x.reshape(B * S, E).astype(jnp.bfloat16)      # batch folded into M
    w_qkv_bf = w_qkv.astype(jnp.bfloat16)
    wo_bf = wo.astype(jnp.bfloat16)
    bo_f32 = bo.astype(jnp.float32)

    if block_b is None:
        block_b = _pick_block_b(B, S)
    assert B % block_b == 0
    m_blk = block_b * S
    grid = (B // block_b,)

    # Advisory scheduling cost for the fused kernel.
    flops = 2 * (B * S) * E * 3 * HD                   # fused QKV projection
    flops += B * H * (2 * S * S * D) * 2               # q k^T and p v
    flops += B * H * 2 * S * D * E                     # per-head out projection
    transcendentals = B * H * S * S                    # exp
    bytes_accessed = (x2.size * 2 + w_qkv_bf.size * 2 + wo_bf.size * 2
                      + b_qkv.size * 4 + bo_f32.size * 4 + B * S * E * 4)

    kernel = functools.partial(_mhsa_kernel, n_heads=H, qkv_dim=D,
                               block_b=block_b, seq_len=S)

    out = pl.pallas_call(
        kernel,
        out_shape=jax.ShapeDtypeStruct((B * S, E), x.dtype),
        grid_spec=pltpu.PrefetchScalarGridSpec(
            num_scalar_prefetch=0,
            grid=grid,
            in_specs=[
                pl.BlockSpec((m_blk, E), lambda i: (i, 0)),        # x tokens
                pl.BlockSpec((E, 3 * HD), lambda i: (0, 0)),       # W_qkv
                pl.BlockSpec((1, 3 * HD), lambda i: (0, 0)),       # b_qkv
                pl.BlockSpec((HD, E), lambda i: (0, 0)),           # W_o
                pl.BlockSpec((1, E), lambda i: (0, 0)),            # b_o
            ],
            out_specs=pl.BlockSpec((m_blk, E), lambda i: (i, 0)),
        ),
        compiler_params=pltpu.CompilerParams(
            dimension_semantics=("parallel",)),
        cost_estimate=pl.CostEstimate(flops=flops,
                                      transcendentals=transcendentals,
                                      bytes_accessed=bytes_accessed),
    )(x2, w_qkv_bf, b_qkv, wo_bf, bo_f32)
    return out.reshape(B, S, E)


# ----------------------------------------------------------------------------
# Pure-JAX f32 reference for validation (eval-mode PyTorch semantics).
# ----------------------------------------------------------------------------
def reference(x, params):
    wq, bq, wk, bk, wv, bv, wo, bo = params
    D = wq.shape[-1]
    scale = float(D) ** -0.5
    q = jnp.einsum("bse,hed->bhsd", x, wq) + bq[:, None, 0, :][None]
    k = jnp.einsum("bse,hed->bhsd", x, wk) + bk[:, None, 0, :][None]
    v = jnp.einsum("bse,hed->bhsd", x, wv) + bv[:, None, 0, :][None]
    s = jnp.einsum("bhqd,bhkd->bhqk", q, k) * scale
    p = jax.nn.softmax(s, axis=-1)
    o = jnp.einsum("bhqk,bhkd->bhqd", p, v)
    B, H, S, _ = o.shape
    c = jnp.transpose(o, (0, 2, 1, 3)).reshape(B, S, H * D)
    return c @ wo + bo[0]


if __name__ == "__main__":
    # Small, TPU-friendly shapes consistent with the module's forward:
    B, S = 2, 8            # batch, sequence length
    E = 32                 # embed_dim
    H, D = 4, 8            # n_heads, qkv_dim

    key = jax.random.PRNGKey(0)
    ks = jax.random.split(key, 9)
    x  = jax.random.normal(ks[0], (B, S, E), dtype=jnp.float32)

    wq = jax.random.normal(ks[1], (H, E, D), dtype=jnp.float32) * 0.05
    bq = jax.random.normal(ks[2], (H, 1, D), dtype=jnp.float32) * 0.05
    wk = jax.random.normal(ks[3], (H, E, D), dtype=jnp.float32) * 0.05
    bk = jax.random.normal(ks[4], (H, 1, D), dtype=jnp.float32) * 0.05
    wv = jax.random.normal(ks[5], (H, E, D), dtype=jnp.float32) * 0.05
    bv = jax.random.normal(ks[6], (H, 1, D), dtype=jnp.float32) * 0.05
    wo = jax.random.normal(ks[7], (H * D, E), dtype=jnp.float32) * 0.05
    bo = jax.random.normal(ks[8], (1, E), dtype=jnp.float32) * 0.05
    params = (wq, bq, wk, bk, wv, bv, wo, bo)

    out = multi_head_self_attention(x, params)
    out = jax.block_until_ready(out)

    ref = jax.block_until_ready(reference(x, params))
    assert out.shape == (B, S, E), out.shape
    # Tolerance accounts for bf16 MXU operands and pl.reciprocal(approx=True);
    # the softmax / accumulations themselves stay f32.
    assert jnp.allclose(out, ref, atol=2e-2, rtol=2e-2), \
        float(jnp.max(jnp.abs(out - ref)))

    print("KERNEL_OK")
</pallas_src>

<mosaic_0001>
module attributes {stable_mosaic.version = 11 : i64} {
  func.func @_mhsa_kernel(%arg0: i32, %arg1: memref<16x32xbf16, #tpu.memory_space<vmem>>, %arg2: memref<32x96xbf16, #tpu.memory_space<vmem>>, %arg3: memref<1x96xf32, #tpu.memory_space<vmem>>, %arg4: memref<32x32xbf16, #tpu.memory_space<vmem>>, %arg5: memref<1x32xf32, #tpu.memory_space<vmem>>, %arg6: memref<16x32xf32, #tpu.memory_space<vmem>>) attributes {dimension_semantics = [#tpu.dimension_semantics<parallel>], iteration_bounds = array<i64: 1>, scalar_prefetch = 0 : i64, scratch_operands = 0 : i64, tpu.core_type = #tpu.core_type<tc>, window_params = [{transform_indices = @transform_0, window_bounds = array<i64: 16, 32>}, {pipeline_mode = #tpu.pipeline_mode<synchronous>, transform_indices = @transform_1, window_bounds = array<i64: 32, 96>}, {pipeline_mode = #tpu.pipeline_mode<synchronous>, transform_indices = @transform_2, window_bounds = array<i64: 1, 96>}, {pipeline_mode = #tpu.pipeline_mode<synchronous>, transform_indices = @transform_3, window_bounds = array<i64: 32, 32>}, {pipeline_mode = #tpu.pipeline_mode<synchronous>, transform_indices = @transform_4, window_bounds = array<i64: 1, 32>}, {transform_indices = @transform_5, window_bounds = array<i64: 16, 32>}]} {
    %c0 = arith.constant 0 : index
    %c0_0 = arith.constant 0 : index
    %0 = vector.load %arg1[%c0, %c0_0] : memref<16x32xbf16, #tpu.memory_space<vmem>>, vector<16x32xbf16>
    %c0_1 = arith.constant 0 : index
    %c0_2 = arith.constant 0 : index
    %1 = vector.load %arg2[%c0_1, %c0_2] : memref<32x96xbf16, #tpu.memory_space<vmem>>, vector<32x96xbf16>
    %c0_3 = arith.constant 0 : index
    %c0_4 = arith.constant 0 : index
    %2 = vector.load %arg4[%c0_3, %c0_4] : memref<32x32xbf16, #tpu.memory_space<vmem>>, vector<32x32xbf16>
    %c0_5 = arith.constant 0 : index
    %c0_6 = arith.constant 0 : index
    %3 = vector.load %arg3[%c0_5, %c0_6] : memref<1x96xf32, #tpu.memory_space<vmem>>, vector<1x96xf32>
    %c0_7 = arith.constant 0 : index
    %c0_8 = arith.constant 0 : index
    %4 = vector.load %arg5[%c0_7, %c0_8] : memref<1x32xf32, #tpu.memory_space<vmem>>, vector<1x32xf32>
    %cst = arith.constant dense<0.000000e+00> : vector<16x96xf32>
    %5 = tpu.matmul %0, %1, %cst {dimension_numbers = #tpu.dot_dimension_numbers<[1], [0], [0], [1], [0, 0, 1, 1], [], []>} : vector<16x32xbf16>, vector<32x96xbf16>, vector<16x96xf32> -> vector<16x96xf32>
    %6 = vector.broadcast %3 : vector<1x96xf32> to vector<16x96xf32>
    %7 = arith.addf %5, %6 : vector<16x96xf32>
    %8 = vector.extract_strided_slice %7 {offsets = [0, 0], sizes = [8, 96], strides = [1, 1]} : vector<16x96xf32> to vector<8x96xf32>
    %cst_9 = arith.constant 0.000000e+00 : f32
    %9 = vector.broadcast %cst_9 : f32 to vector<8x32xf32>
    %10 = vector.extract_strided_slice %8 {offsets = [0, 0], sizes = [8, 24], strides = [1, 1]} : vector<8x96xf32> to vector<8x24xf32>
    %11 = vector.extract_strided_slice %10 {offsets = [0, 0], sizes = [8, 8], strides = [1, 1]} : vector<8x24xf32> to vector<8x8xf32>
    %12 = arith.truncf %11 : vector<8x8xf32> to vector<8x8xbf16>
    %13 = vector.extract_strided_slice %10 {offsets = [0, 8], sizes = [8, 8], strides = [1, 1]} : vector<8x24xf32> to vector<8x8xf32>
    %14 = arith.truncf %13 : vector<8x8xf32> to vector<8x8xbf16>
    %15 = vector.extract_strided_slice %10 {offsets = [0, 16], sizes = [8, 8], strides = [1, 1]} : vector<8x24xf32> to vector<8x8xf32>
    %16 = arith.truncf %15 : vector<8x8xf32> to vector<8x8xbf16>
    %cst_10 = arith.constant dense<0.000000e+00> : vector<8x8xf32>
    %17 = tpu.matmul %12, %14, %cst_10 {dimension_numbers = #tpu.dot_dimension_numbers<[1], [1], [0], [0], [0, 0, 1, 0], [], []>} : vector<8x8xbf16>, vector<8x8xbf16>, vector<8x8xf32> -> vector<8x8xf32>
    %cst_11 = arith.constant dense<0xFF800000> : vector<8xf32>
    %18 = vector.multi_reduction <maximumf>, %17, %cst_11 [1] : vector<8x8xf32> to vector<8xf32>
    %19 = vector.shape_cast %18 : vector<8xf32> to vector<8x1xf32>
    %20 = vector.broadcast %19 : vector<8x1xf32> to vector<8x8xf32>
    %21 = arith.subf %17, %20 : vector<8x8xf32>
    %22 = math.exp %21 : vector<8x8xf32>
    %cst_12 = arith.constant dense<0.000000e+00> : vector<8xf32>
    %23 = vector.multi_reduction <add>, %22, %cst_12 [1] : vector<8x8xf32> to vector<8xf32>
    %24 = vector.shape_cast %23 : vector<8xf32> to vector<8x1xf32>
    %25 = tpu.reciprocal %24 {approx = true} : vector<8x1xf32> -> vector<8x1xf32>
    %26 = vector.broadcast %25 : vector<8x1xf32> to vector<8x8xf32>
    %27 = arith.mulf %22, %26 : vector<8x8xf32>
    %28 = arith.truncf %27 : vector<8x8xf32> to vector<8x8xbf16>
    %cst_13 = arith.constant dense<0.000000e+00> : vector<8x8xf32>
    %29 = tpu.matmul %28, %16, %cst_13 {dimension_numbers = #tpu.dot_dimension_numbers<[1], [0], [0], [1], [0, 0, 1, 1], [], []>} : vector<8x8xbf16>, vector<8x8xbf16>, vector<8x8xf32> -> vector<8x8xf32>
    %30 = vector.extract_strided_slice %2 {offsets = [0, 0], sizes = [8, 32], strides = [1, 1]} : vector<32x32xbf16> to vector<8x32xbf16>
    %31 = arith.truncf %29 : vector<8x8xf32> to vector<8x8xbf16>
    %cst_14 = arith.constant dense<0.000000e+00> : vector<8x32xf32>
    %32 = tpu.matmul %31, %30, %cst_14 {dimension_numbers = #tpu.dot_dimension_numbers<[1], [0], [0], [1], [0, 0, 1, 1], [], []>} : vector<8x8xbf16>, vector<8x32xbf16>, vector<8x32xf32> -> vector<8x32xf32>
    %33 = arith.addf %9, %32 : vector<8x32xf32>
    %34 = vector.extract_strided_slice %8 {offsets = [0, 24], sizes = [8, 24], strides = [1, 1]} : vector<8x96xf32> to vector<8x24xf32>
    %35 = vector.extract_strided_slice %34 {offsets = [0, 0], sizes = [8, 8], strides = [1, 1]} : vector<8x24xf32> to vector<8x8xf32>
    %36 = arith.truncf %35 : vector<8x8xf32> to vector<8x8xbf16>
    %37 = vector.extract_strided_slice %34 {offsets = [0, 8], sizes = [8, 8], strides = [1, 1]} : vector<8x24xf32> to vector<8x8xf32>
    %38 = arith.truncf %37 : vector<8x8xf32> to vector<8x8xbf16>
    %39 = vector.extract_strided_slice %34 {offsets = [0, 16], sizes = [8, 8], strides = [1, 1]} : vector<8x24xf32> to vector<8x8xf32>
    %40 = arith.truncf %39 : vector<8x8xf32> to vector<8x8xbf16>
    %cst_15 = arith.constant dense<0.000000e+00> : vector<8x8xf32>
    %41 = tpu.matmul %36, %38, %cst_15 {dimension_numbers = #tpu.dot_dimension_numbers<[1], [1], [0], [0], [0, 0, 1, 0], [], []>} : vector<8x8xbf16>, vector<8x8xbf16>, vector<8x8xf32> -> vector<8x8xf32>
    %cst_16 = arith.constant dense<0xFF800000> : vector<8xf32>
    %42 = vector.multi_reduction <maximumf>, %41, %cst_16 [1] : vector<8x8xf32> to vector<8xf32>
    %43 = vector.shape_cast %42 : vector<8xf32> to vector<8x1xf32>
    %44 = vector.broadcast %43 : vector<8x1xf32> to vector<8x8xf32>
    %45 = arith.subf %41, %44 : vector<8x8xf32>
    %46 = math.exp %45 : vector<8x8xf32>
    %cst_17 = arith.constant dense<0.000000e+00> : vector<8xf32>
    %47 = vector.multi_reduction <add>, %46, %cst_17 [1] : vector<8x8xf32> to vector<8xf32>
    %48 = vector.shape_cast %47 : vector<8xf32> to vector<8x1xf32>
    %49 = tpu.reciprocal %48 {approx = true} : vector<8x1xf32> -> vector<8x1xf32>
    %50 = vector.broadcast %49 : vector<8x1xf32> to vector<8x8xf32>
    %51 = arith.mulf %46, %50 : vector<8x8xf32>
    %52 = arith.truncf %51 : vector<8x8xf32> to vector<8x8xbf16>
    %cst_18 = arith.constant dense<0.000000e+00> : vector<8x8xf32>
    %53 = tpu.matmul %52, %40, %cst_18 {dimension_numbers = #tpu.dot_dimension_numbers<[1], [0], [0], [1], [0, 0, 1, 1], [], []>} : vector<8x8xbf16>, vector<8x8xbf16>, vector<8x8xf32> -> vector<8x8xf32>
    %54 = vector.extract_strided_slice %2 {offsets = [8, 0], sizes = [8, 32], strides = [1, 1]} : vector<32x32xbf16> to vector<8x32xbf16>
    %55 = arith.truncf %53 : vector<8x8xf32> to vector<8x8xbf16>
    %cst_19 = arith.constant dense<0.000000e+00> : vector<8x32xf32>
    %56 = tpu.matmul %55, %54, %cst_19 {dimension_numbers = #tpu.dot_dimension_numbers<[1], [0], [0], [1], [0, 0, 1, 1], [], []>} : vector<8x8xbf16>, vector<8x32xbf16>, vector<8x32xf32> -> vector<8x32xf32>
    %57 = arith.addf %33, %56 : vector<8x32xf32>
    %58 = vector.extract_strided_slice %8 {offsets = [0, 48], sizes = [8, 24], strides = [1, 1]} : vector<8x96xf32> to vector<8x24xf32>
    %59 = vector.extract_strided_slice %58 {offsets = [0, 0], sizes = [8, 8], strides = [1, 1]} : vector<8x24xf32> to vector<8x8xf32>
    %60 = arith.truncf %59 : vector<8x8xf32> to vector<8x8xbf16>
    %61 = vector.extract_strided_slice %58 {offsets = [0, 8], sizes = [8, 8], strides = [1, 1]} : vector<8x24xf32> to vector<8x8xf32>
    %62 = arith.truncf %61 : vector<8x8xf32> to vector<8x8xbf16>
    %63 = vector.extract_strided_slice %58 {offsets = [0, 16], sizes = [8, 8], strides = [1, 1]} : vector<8x24xf32> to vector<8x8xf32>
    %64 = arith.truncf %63 : vector<8x8xf32> to vector<8x8xbf16>
    %cst_20 = arith.constant dense<0.000000e+00> : vector<8x8xf32>
    %65 = tpu.matmul %60, %62, %cst_20 {dimension_numbers = #tpu.dot_dimension_numbers<[1], [1], [0], [0], [0, 0, 1, 0], [], []>} : vector<8x8xbf16>, vector<8x8xbf16>, vector<8x8xf32> -> vector<8x8xf32>
    %cst_21 = arith.constant dense<0xFF800000> : vector<8xf32>
    %66 = vector.multi_reduction <maximumf>, %65, %cst_21 [1] : vector<8x8xf32> to vector<8xf32>
    %67 = vector.shape_cast %66 : vector<8xf32> to vector<8x1xf32>
    %68 = vector.broadcast %67 : vector<8x1xf32> to vector<8x8xf32>
    %69 = arith.subf %65, %68 : vector<8x8xf32>
    %70 = math.exp %69 : vector<8x8xf32>
    %cst_22 = arith.constant dense<0.000000e+00> : vector<8xf32>
    %71 = vector.multi_reduction <add>, %70, %cst_22 [1] : vector<8x8xf32> to vector<8xf32>
    %72 = vector.shape_cast %71 : vector<8xf32> to vector<8x1xf32>
    %73 = tpu.reciprocal %72 {approx = true} : vector<8x1xf32> -> vector<8x1xf32>
    %74 = vector.broadcast %73 : vector<8x1xf32> to vector<8x8xf32>
    %75 = arith.mulf %70, %74 : vector<8x8xf32>
    %76 = arith.truncf %75 : vector<8x8xf32> to vector<8x8xbf16>
    %cst_23 = arith.constant dense<0.000000e+00> : vector<8x8xf32>
    %77 = tpu.matmul %76, %64, %cst_23 {dimension_numbers = #tpu.dot_dimension_numbers<[1], [0], [0], [1], [0, 0, 1, 1], [], []>} : vector<8x8xbf16>, vector<8x8xbf16>, vector<8x8xf32> -> vector<8x8xf32>
    %78 = vector.extract_strided_slice %2 {offsets = [16, 0], sizes = [8, 32], strides = [1, 1]} : vector<32x32xbf16> to vector<8x32xbf16>
    %79 = arith.truncf %77 : vector<8x8xf32> to vector<8x8xbf16>
    %cst_24 = arith.constant dense<0.000000e+00> : vector<8x32xf32>
    %80 = tpu.matmul %79, %78, %cst_24 {dimension_numbers = #tpu.dot_dimension_numbers<[1], [0], [0], [1], [0, 0, 1, 1], [], []>} : vector<8x8xbf16>, vector<8x32xbf16>, vector<8x32xf32> -> vector<8x32xf32>
    %81 = arith.addf %57, %80 : vector<8x32xf32>
    %82 = vector.extract_strided_slice %8 {offsets = [0, 72], sizes = [8, 24], strides = [1, 1]} : vector<8x96xf32> to vector<8x24xf32>
    %83 = vector.extract_strided_slice %82 {offsets = [0, 0], sizes = [8, 8], strides = [1, 1]} : vector<8x24xf32> to vector<8x8xf32>
    %84 = arith.truncf %83 : vector<8x8xf32> to vector<8x8xbf16>
    %85 = vector.extract_strided_slice %82 {offsets = [0, 8], sizes = [8, 8], strides = [1, 1]} : vector<8x24xf32> to vector<8x8xf32>
    %86 = arith.truncf %85 : vector<8x8xf32> to vector<8x8xbf16>
    %87 = vector.extract_strided_slice %82 {offsets = [0, 16], sizes = [8, 8], strides = [1, 1]} : vector<8x24xf32> to vector<8x8xf32>
    %88 = arith.truncf %87 : vector<8x8xf32> to vector<8x8xbf16>
    %cst_25 = arith.constant dense<0.000000e+00> : vector<8x8xf32>
    %89 = tpu.matmul %84, %86, %cst_25 {dimension_numbers = #tpu.dot_dimension_numbers<[1], [1], [0], [0], [0, 0, 1, 0], [], []>} : vector<8x8xbf16>, vector<8x8xbf16>, vector<8x8xf32> -> vector<8x8xf32>
    %cst_26 = arith.constant dense<0xFF800000> : vector<8xf32>
    %90 = vector.multi_reduction <maximumf>, %89, %cst_26 [1] : vector<8x8xf32> to vector<8xf32>
    %91 = vector.shape_cast %90 : vector<8xf32> to vector<8x1xf32>
    %92 = vector.broadcast %91 : vector<8x1xf32> to vector<8x8xf32>
    %93 = arith.subf %89, %92 : vector<8x8xf32>
    %94 = math.exp %93 : vector<8x8xf32>
    %cst_27 = arith.constant dense<0.000000e+00> : vector<8xf32>
    %95 = vector.multi_reduction <add>, %94, %cst_27 [1] : vector<8x8xf32> to vector<8xf32>
    %96 = vector.shape_cast %95 : vector<8xf32> to vector<8x1xf32>
    %97 = tpu.reciprocal %96 {approx = true} : vector<8x1xf32> -> vector<8x1xf32>
    %98 = vector.broadcast %97 : vector<8x1xf32> to vector<8x8xf32>
    %99 = arith.mulf %94, %98 : vector<8x8xf32>
    %100 = arith.truncf %99 : vector<8x8xf32> to vector<8x8xbf16>
    %cst_28 = arith.constant dense<0.000000e+00> : vector<8x8xf32>
    %101 = tpu.matmul %100, %88, %cst_28 {dimension_numbers = #tpu.dot_dimension_numbers<[1], [0], [0], [1], [0, 0, 1, 1], [], []>} : vector<8x8xbf16>, vector<8x8xbf16>, vector<8x8xf32> -> vector<8x8xf32>
    %102 = vector.extract_strided_slice %2 {offsets = [24, 0], sizes = [8, 32], strides = [1, 1]} : vector<32x32xbf16> to vector<8x32xbf16>
    %103 = arith.truncf %101 : vector<8x8xf32> to vector<8x8xbf16>
    %cst_29 = arith.constant dense<0.000000e+00> : vector<8x32xf32>
    %104 = tpu.matmul %103, %102, %cst_29 {dimension_numbers = #tpu.dot_dimension_numbers<[1], [0], [0], [1], [0, 0, 1, 1], [], []>} : vector<8x8xbf16>, vector<8x32xbf16>, vector<8x32xf32> -> vector<8x32xf32>
    %105 = arith.addf %81, %104 : vector<8x32xf32>
    %106 = vector.broadcast %4 : vector<1x32xf32> to vector<8x32xf32>
    %107 = arith.addf %105, %106 : vector<8x32xf32>
    %c0_30 = arith.constant 0 : index
    %c0_31 = arith.constant 0 : index
    %108 = vector.load %arg6[%c0_30, %c0_31] : memref<16x32xf32, #tpu.memory_space<vmem>>, vector<8x32xf32>
    tpu.vector_store %arg6[%c0_30, %c0_31], %107 {strides = array<i32>} : memref<16x32xf32, #tpu.memory_space<vmem>>, vector<8x32xf32>,
    %109 = vector.extract_strided_slice %7 {offsets = [8, 0], sizes = [8, 96], strides = [1, 1]} : vector<16x96xf32> to vector<8x96xf32>
    %cst_32 = arith.constant 0.000000e+00 : f32
    %110 = vector.broadcast %cst_32 : f32 to vector<8x32xf32>
    %111 = vector.extract_strided_slice %109 {offsets = [0, 0], sizes = [8, 24], strides = [1, 1]} : vector<8x96xf32> to vector<8x24xf32>
    %112 = vector.extract_strided_slice %111 {offsets = [0, 0], sizes = [8, 8], strides = [1, 1]} : vector<8x24xf32> to vector<8x8xf32>
    %113 = arith.truncf %112 : vector<8x8xf32> to vector<8x8xbf16>
    %114 = vector.extract_strided_slice %111 {offsets = [0, 8], sizes = [8, 8], strides = [1, 1]} : vector<8x24xf32> to vector<8x8xf32>
    %115 = arith.truncf %114 : vector<8x8xf32> to vector<8x8xbf16>
    %116 = vector.extract_strided_slice %111 {offsets = [0, 16], sizes = [8, 8], strides = [1, 1]} : vector<8x24xf32> to vector<8x8xf32>
    %117 = arith.truncf %116 : vector<8x8xf32> to vector<8x8xbf16>
    %cst_33 = arith.constant dense<0.000000e+00> : vector<8x8xf32>
    %118 = tpu.matmul %113, %115, %cst_33 {dimension_numbers = #tpu.dot_dimension_numbers<[1], [1], [0], [0], [0, 0, 1, 0], [], []>} : vector<8x8xbf16>, vector<8x8xbf16>, vector<8x8xf32> -> vector<8x8xf32>
    %cst_34 = arith.constant dense<0xFF800000> : vector<8xf32>
    %119 = vector.multi_reduction <maximumf>, %118, %cst_34 [1] : vector<8x8xf32> to vector<8xf32>
    %120 = vector.shape_cast %119 : vector<8xf32> to vector<8x1xf32>
    %121 = vector.broadcast %120 : vector<8x1xf32> to vector<8x8xf32>
    %122 = arith.subf %118, %121 : vector<8x8xf32>
    %123 = math.exp %122 : vector<8x8xf32>
    %cst_35 = arith.constant dense<0.000000e+00> : vector<8xf32>
    %124 = vector.multi_reduction <add>, %123, %cst_35 [1] : vector<8x8xf32> to vector<8xf32>
    %125 = vector.shape_cast %124 : vector<8xf32> to vector<8x1xf32>
    %126 = tpu.reciprocal %125 {approx = true} : vector<8x1xf32> -> vector<8x1xf32>
    %127 = vector.broadcast %126 : vector<8x1xf32> to vector<8x8xf32>
    %128 = arith.mulf %123, %127 : vector<8x8xf32>
    %129 = arith.truncf %128 : vector<8x8xf32> to vector<8x8xbf16>
    %cst_36 = arith.constant dense<0.000000e+00> : vector<8x8xf32>
    %130 = tpu.matmul %129, %117, %cst_36 {dimension_numbers = #tpu.dot_dimension_numbers<[1], [0], [0], [1], [0, 0, 1, 1], [], []>} : vector<8x8xbf16>, vector<8x8xbf16>, vector<8x8xf32> -> vector<8x8xf32>
    %131 = vector.extract_strided_slice %2 {offsets = [0, 0], sizes = [8, 32], strides = [1, 1]} : vector<32x32xbf16> to vector<8x32xbf16>
    %132 = arith.truncf %130 : vector<8x8xf32> to vector<8x8xbf16>
    %cst_37 = arith.constant dense<0.000000e+00> : vector<8x32xf32>
    %133 = tpu.matmul %132, %131, %cst_37 {dimension_numbers = #tpu.dot_dimension_numbers<[1], [0], [0], [1], [0, 0, 1, 1], [], []>} : vector<8x8xbf16>, vector<8x32xbf16>, vector<8x32xf32> -> vector<8x32xf32>
    %134 = arith.addf %110, %133 : vector<8x32xf32>
    %135 = vector.extract_strided_slice %109 {offsets = [0, 24], sizes = [8, 24], strides = [1, 1]} : vector<8x96xf32> to vector<8x24xf32>
    %136 = vector.extract_strided_slice %135 {offsets = [0, 0], sizes = [8, 8], strides = [1, 1]} : vector<8x24xf32> to vector<8x8xf32>
    %137 = arith.truncf %136 : vector<8x8xf32> to vector<8x8xbf16>
    %138 = vector.extract_strided_slice %135 {offsets = [0, 8], sizes = [8, 8], strides = [1, 1]} : vector<8x24xf32> to vector<8x8xf32>
    %139 = arith.truncf %138 : vector<8x8xf32> to vector<8x8xbf16>
    %140 = vector.extract_strided_slice %135 {offsets = [0, 16], sizes = [8, 8], strides = [1, 1]} : vector<8x24xf32> to vector<8x8xf32>
    %141 = arith.truncf %140 : vector<8x8xf32> to vector<8x8xbf16>
    %cst_38 = arith.constant dense<0.000000e+00> : vector<8x8xf32>
    %142 = tpu.matmul %137, %139, %cst_38 {dimension_numbers = #tpu.dot_dimension_numbers<[1], [1], [0], [0], [0, 0, 1, 0], [], []>} : vector<8x8xbf16>, vector<8x8xbf16>, vector<8x8xf32> -> vector<8x8xf32>
    %cst_39 = arith.constant dense<0xFF800000> : vector<8xf32>
    %143 = vector.multi_reduction <maximumf>, %142, %cst_39 [1] : vector<8x8xf32> to vector<8xf32>
    %144 = vector.shape_cast %143 : vector<8xf32> to vector<8x1xf32>
    %145 = vector.broadcast %144 : vector<8x1xf32> to vector<8x8xf32>
    %146 = arith.subf %142, %145 : vector<8x8xf32>
    %147 = math.exp %146 : vector<8x8xf32>
    %cst_40 = arith.constant dense<0.000000e+00> : vector<8xf32>
    %148 = vector.multi_reduction <add>, %147, %cst_40 [1] : vector<8x8xf32> to vector<8xf32>
    %149 = vector.shape_cast %148 : vector<8xf32> to vector<8x1xf32>
    %150 = tpu.reciprocal %149 {approx = true} : vector<8x1xf32> -> vector<8x1xf32>
    %151 = vector.broadcast %150 : vector<8x1xf32> to vector<8x8xf32>
    %152 = arith.mulf %147, %151 : vector<8x8xf32>
    %153 = arith.truncf %152 : vector<8x8xf32> to vector<8x8xbf16>
    %cst_41 = arith.constant dense<0.000000e+00> : vector<8x8xf32>
    %154 = tpu.matmul %153, %141, %cst_41 {dimension_numbers = #tpu.dot_dimension_numbers<[1], [0], [0], [1], [0, 0, 1, 1], [], []>} : vector<8x8xbf16>, vector<8x8xbf16>, vector<8x8xf32> -> vector<8x8xf32>
    %155 = vector.extract_strided_slice %2 {offsets = [8, 0], sizes = [8, 32], strides = [1, 1]} : vector<32x32xbf16> to vector<8x32xbf16>
    %156 = arith.truncf %154 : vector<8x8xf32> to vector<8x8xbf16>
    %cst_42 = arith.constant dense<0.000000e+00> : vector<8x32xf32>
    %157 = tpu.matmul %156, %155, %cst_42 {dimension_numbers = #tpu.dot_dimension_numbers<[1], [0], [0], [1], [0, 0, 1, 1], [], []>} : vector<8x8xbf16>, vector<8x32xbf16>, vector<8x32xf32> -> vector<8x32xf32>
    %158 = arith.addf %134, %157 : vector<8x32xf32>
    %159 = vector.extract_strided_slice %109 {offsets = [0, 48], sizes = [8, 24], strides = [1, 1]} : vector<8x96xf32> to vector<8x24xf32>
    %160 = vector.extract_strided_slice %159 {offsets = [0, 0], sizes = [8, 8], strides = [1, 1]} : vector<8x24xf32> to vector<8x8xf32>
    %161 = arith.truncf %160 : vector<8x8xf32> to vector<8x8xbf16>
    %162 = vector.extract_strided_slice %159 {offsets = [0, 8], sizes = [8, 8], strides = [1, 1]} : vector<8x24xf32> to vector<8x8xf32>
    %163 = arith.truncf %162 : vector<8x8xf32> to vector<8x8xbf16>
    %164 = vector.extract_strided_slice %159 {offsets = [0, 16], sizes = [8, 8], strides = [1, 1]} : vector<8x24xf32> to vector<8x8xf32>
    %165 = arith.truncf %164 : vector<8x8xf32> to vector<8x8xbf16>
    %cst_43 = arith.constant dense<0.000000e+00> : vector<8x8xf32>
    %166 = tpu.matmul %161, %163, %cst_43 {dimension_numbers = #tpu.dot_dimension_numbers<[1], [1], [0], [0], [0, 0, 1, 0], [], []>} : vector<8x8xbf16>, vector<8x8xbf16>, vector<8x8xf32> -> vector<8x8xf32>
    %cst_44 = arith.constant dense<0xFF800000> : vector<8xf32>
    %167 = vector.multi_reduction <maximumf>, %166, %cst_44 [1] : vector<8x8xf32> to vector<8xf32>
    %168 = vector.shape_cast %167 : vector<8xf32> to vector<8x1xf32>
    %169 = vector.broadcast %168 : vector<8x1xf32> to vector<8x8xf32>
    %170 = arith.subf %166, %169 : vector<8x8xf32>
    %171 = math.exp %170 : vector<8x8xf32>
    %cst_45 = arith.constant dense<0.000000e+00> : vector<8xf32>
    %172 = vector.multi_reduction <add>, %171, %cst_45 [1] : vector<8x8xf32> to vector<8xf32>
    %173 = vector.shape_cast %172 : vector<8xf32> to vector<8x1xf32>
    %174 = tpu.reciprocal %173 {approx = true} : vector<8x1xf32> -> vector<8x1xf32>
    %175 = vector.broadcast %174 : vector<8x1xf32> to vector<8x8xf32>
    %176 = arith.mulf %171, %175 : vector<8x8xf32>
    %177 = arith.truncf %176 : vector<8x8xf32> to vector<8x8xbf16>
    %cst_46 = arith.constant dense<0.000000e+00> : vector<8x8xf32>
    %178 = tpu.matmul %177, %165, %cst_46 {dimension_numbers = #tpu.dot_dimension_numbers<[1], [0], [0], [1], [0, 0, 1, 1], [], []>} : vector<8x8xbf16>, vector<8x8xbf16>, vector<8x8xf32> -> vector<8x8xf32>
    %179 = vector.extract_strided_slice %2 {offsets = [16, 0], sizes = [8, 32], strides = [1, 1]} : vector<32x32xbf16> to vector<8x32xbf16>
    %180 = arith.truncf %178 : vector<8x8xf32> to vector<8x8xbf16>
    %cst_47 = arith.constant dense<0.000000e+00> : vector<8x32xf32>
    %181 = tpu.matmul %180, %179, %cst_47 {dimension_numbers = #tpu.dot_dimension_numbers<[1], [0], [0], [1], [0, 0, 1, 1], [], []>} : vector<8x8xbf16>, vector<8x32xbf16>, vector<8x32xf32> -> vector<8x32xf32>
    %182 = arith.addf %158, %181 : vector<8x32xf32>
    %183 = vector.extract_strided_slice %109 {offsets = [0, 72], sizes = [8, 24], strides = [1, 1]} : vector<8x96xf32> to vector<8x24xf32>
    %184 = vector.extract_strided_slice %183 {offsets = [0, 0], sizes = [8, 8], strides = [1, 1]} : vector<8x24xf32> to vector<8x8xf32>
    %185 = arith.truncf %184 : vector<8x8xf32> to vector<8x8xbf16>
    %186 = vector.extract_strided_slice %183 {offsets = [0, 8], sizes = [8, 8], strides = [1, 1]} : vector<8x24xf32> to vector<8x8xf32>
    %187 = arith.truncf %186 : vector<8x8xf32> to vector<8x8xbf16>
    %188 = vector.extract_strided_slice %183 {offsets = [0, 16], sizes = [8, 8], strides = [1, 1]} : vector<8x24xf32> to vector<8x8xf32>
    %189 = arith.truncf %188 : vector<8x8xf32> to vector<8x8xbf16>
    %cst_48 = arith.constant dense<0.000000e+00> : vector<8x8xf32>
    %190 = tpu.matmul %185, %187, %cst_48 {dimension_numbers = #tpu.dot_dimension_numbers<[1], [1], [0], [0], [0, 0, 1, 0], [], []>} : vector<8x8xbf16>, vector<8x8xbf16>, vector<8x8xf32> -> vector<8x8xf32>
    %cst_49 = arith.constant dense<0xFF800000> : vector<8xf32>
    %191 = vector.multi_reduction <maximumf>, %190, %cst_49 [1] : vector<8x8xf32> to vector<8xf32>
    %192 = vector.shape_cast %191 : vector<8xf32> to vector<8x1xf32>
    %193 = vector.broadcast %192 : vector<8x1xf32> to vector<8x8xf32>
    %194 = arith.subf %190, %193 : vector<8x8xf32>
    %195 = math.exp %194 : vector<8x8xf32>
    %cst_50 = arith.constant dense<0.000000e+00> : vector<8xf32>
    %196 = vector.multi_reduction <add>, %195, %cst_50 [1] : vector<8x8xf32> to vector<8xf32>
    %197 = vector.shape_cast %196 : vector<8xf32> to vector<8x1xf32>
    %198 = tpu.reciprocal %197 {approx = true} : vector<8x1xf32> -> vector<8x1xf32>
    %199 = vector.broadcast %198 : vector<8x1xf32> to vector<8x8xf32>
    %200 = arith.mulf %195, %199 : vector<8x8xf32>
    %201 = arith.truncf %200 : vector<8x8xf32> to vector<8x8xbf16>
    %cst_51 = arith.constant dense<0.000000e+00> : vector<8x8xf32>
    %202 = tpu.matmul %201, %189, %cst_51 {dimension_numbers = #tpu.dot_dimension_numbers<[1], [0], [0], [1], [0, 0, 1, 1], [], []>} : vector<8x8xbf16>, vector<8x8xbf16>, vector<8x8xf32> -> vector<8x8xf32>
    %203 = vector.extract_strided_slice %2 {offsets = [24, 0], sizes = [8, 32], strides = [1, 1]} : vector<32x32xbf16> to vector<8x32xbf16>
    %204 = arith.truncf %202 : vector<8x8xf32> to vector<8x8xbf16>
    %cst_52 = arith.constant dense<0.000000e+00> : vector<8x32xf32>
    %205 = tpu.matmul %204, %203, %cst_52 {dimension_numbers = #tpu.dot_dimension_numbers<[1], [0], [0], [1], [0, 0, 1, 1], [], []>} : vector<8x8xbf16>, vector<8x32xbf16>, vector<8x32xf32> -> vector<8x32xf32>
    %206 = arith.addf %182, %205 : vector<8x32xf32>
    %207 = vector.broadcast %4 : vector<1x32xf32> to vector<8x32xf32>
    %208 = arith.addf %206, %207 : vector<8x32xf32>
    %c8 = arith.constant 8 : index
    %c0_53 = arith.constant 0 : index
    %209 = vector.load %arg6[%c8, %c0_53] : memref<16x32xf32, #tpu.memory_space<vmem>>, vector<8x32xf32>
    tpu.vector_store %arg6[%c8, %c0_53], %208 {strides = array<i32>} : memref<16x32xf32, #tpu.memory_space<vmem>>, vector<8x32xf32>,
    return
  }
  func.func @transform_0(%arg0: i32) -> (i32, i32) {
    %c0_i32 = arith.constant 0 : i32
    %c0_i32_0 = arith.constant 0 : i32
    return %arg0, %c0_i32 : i32, i32
  }
  func.func @transform_1(%arg0: i32) -> (i32, i32) {
    %c0_i32 = arith.constant 0 : i32
    %c0_i32_0 = arith.constant 0 : i32
    %c0_i32_1 = arith.constant 0 : i32
    return %c0_i32, %c0_i32_0 : i32, i32
  }
  func.func @transform_2(%arg0: i32) -> (i32, i32) {
    %c0_i32 = arith.constant 0 : i32
    %c0_i32_0 = arith.constant 0 : i32
    %c0_i32_1 = arith.constant 0 : i32
    return %c0_i32, %c0_i32_0 : i32, i32
  }
  func.func @transform_3(%arg0: i32) -> (i32, i32) {
    %c0_i32 = arith.constant 0 : i32
    %c0_i32_0 = arith.constant 0 : i32
    %c0_i32_1 = arith.constant 0 : i32
    return %c0_i32, %c0_i32_0 : i32, i32
  }
  func.func @transform_4(%arg0: i32) -> (i32, i32) {
    %c0_i32 = arith.constant 0 : i32
    %c0_i32_0 = arith.constant 0 : i32
    %c0_i32_1 = arith.constant 0 : i32
    return %c0_i32, %c0_i32_0 : i32, i32
  }
  func.func @transform_5(%arg0: i32) -> (i32, i32) {
    %c0_i32 = arith.constant 0 : i32
    %c0_i32_0 = arith.constant 0 : i32
    return %arg0, %c0_i32 : i32, i32
  }
}

</mosaic_0001>

<llo_original>
// kernel: tpu_custom_call.1
$region0: #{tpu_custom_call.1}
  #allocation0 [shape = 'u32[]', space=smem, size = 0x4, offset = 0x4, fixed_abs, tag = 'smem constant byte address 0x4 - core index']
  #allocation1 [shape = 'u32[144,128]{1,0:T(1,128)}', space=vmem, size = 0x12000, scoped, tag = 'internal scratch']
  %s0 = inlined_call_operand.hbm [shape: bf16[16,32], index: 0, kind: input, shape index: {}]
  %s1 = inlined_call_operand.hbm [shape: bf16[32,96], index: 1, kind: input, shape index: {}]
  %s2 = inlined_call_operand.vmem [shape: f32[1,96], index: 2, kind: input, shape index: {}]
  %s3 = inlined_call_operand.hbm [shape: bf16[32,32], index: 3, kind: input, shape index: {}]
  %s4 = inlined_call_operand.vmem [shape: f32[1,32], index: 4, kind: input, shape index: {}]
  %s5 = inlined_call_operand.hbm [shape: f32[16,32], index: 5, kind: output, shape index: {}]
  %s6 = sld [smem:[#allocation0]]
  $region42: #{tpu_custom_call.1} parent=0
    _
  %s8 = ssub.s32 1, %s6
  %s9 = scalar_select 0, %s8, %s6
  $region1: #{tpu_custom_call.1} parent=0
    #allocation2 [shape = 'u8[4096]{0}', space=vmem, size = 0x1000, scoped, tag = 'input window, operand 0, single buffered']
    #allocation3 [shape = 's32[1]{0}', space=sflag, size = 0x4, scoped, tag = 'scoped memory for tpu_custom_call.1']
    #allocation4 [shape = 's32[1]{0}', space=sflag, size = 0x4, scoped, tag = 'scoped memory for tpu_custom_call.1']
    #allocation5 [shape = 'u8[8192]{0}', space=vmem, size = 0x2000, scoped, tag = 'input window, operand 1, single buffered']
    #allocation6 [shape = 's32[1]{0}', space=sflag, size = 0x4, scoped, tag = 'scoped memory for tpu_custom_call.1']
    #allocation7 [shape = 'u8[8192]{0}', space=vmem, size = 0x2000, scoped, tag = 'input window, operand 3, single buffered']
    #allocation8 [shape = 'u8[8192]{0}', space=vmem, size = 0x2000, scoped, tag = 'output window, operand 0, single buffered']
    %10 = vsyncpa [#allocation3], 0
    %11 = vsyncpa [#allocation6], 0
    %12 = vsyncpa [#allocation4], 0
    // Predicated region
    $region2: #{tpu_custom_call.1} parent=1 // pred_check
      _
    $region3: #{tpu_custom_call.1} parent=1 // pred_check_branch
      %14 = sbr.rel (0) target = $region5
    $region4: #{tpu_custom_call.1} parent=1 // pred_region
      %s16 = ssub.s32 128, 128
      %17 = vsyncadd [#allocation3], %s16
      %s18 = sshll.u32 [#allocation2], 4
      %s19 = int_to_ptr.vmem [resolvable:$true] %s18
      %24 = dma.hbm_to_vmem [thread:$0]  %s0, 128, %s19, [#allocation3], 64, 64, 4
    $region5: #{tpu_custom_call.1} parent=1 // pred_fallthru
      _
    // Predicated region
    $region6: #{tpu_custom_call.1} parent=1 // pred_check
      _
    $region7: #{tpu_custom_call.1} parent=1 // pred_check_branch
      %26 = sbr.rel (0) target = $region9
    $region8: #{tpu_custom_call.1} parent=1 // pred_region
      %s28 = ssub.s32 256, 256
      %29 = vsyncadd [#allocation6], %s28
      %s30 = sshll.u32 [#allocation5], 4
      %s31 = int_to_ptr.vmem [resolvable:$true] %s30
      %36 = dma.hbm_to_vmem [thread:$0]  %s1, 256, %s31, [#allocation6], 64, 64, 4
    $region9: #{tpu_custom_call.1} parent=1 // pred_fallthru
      _
    // Predicated region
    $region10: #{tpu_custom_call.1} parent=1 // pred_check
      _
    $region11: #{tpu_custom_call.1} parent=1 // pred_check_branch
      %38 = sbr.rel (0) target = $region13
    $region12: #{tpu_custom_call.1} parent=1 // pred_region
      _
    $region13: #{tpu_custom_call.1} parent=1 // pred_fallthru
      _
    // Predicated region
    $region14: #{tpu_custom_call.1} parent=1 // pred_check
      _
    $region15: #{tpu_custom_call.1} parent=1 // pred_check_branch
      %40 = sbr.rel (0) target = $region17
    $region16: #{tpu_custom_call.1} parent=1 // pred_region
      %s42 = ssub.s32 256, 256
      %43 = vsyncadd [#allocation6], %s42
      %s44 = sshll.u32 [#allocation7], 4
      %s45 = int_to_ptr.vmem [resolvable:$true] %s44
      %50 = dma.hbm_to_vmem [thread:$0]  %s3, 256, %s45, [#allocation6], 64, 64, 4
    $region17: #{tpu_custom_call.1} parent=1 // pred_fallthru
      _
    // Predicated region
    $region18: #{tpu_custom_call.1} parent=1 // pred_check
      _
    $region19: #{tpu_custom_call.1} parent=1 // pred_check_branch
      %52 = sbr.rel (0) target = $region21
    $region20: #{tpu_custom_call.1} parent=1 // pred_region
      _
    $region21: #{tpu_custom_call.1} parent=1 // pred_fallthru
      _
    // Predicated region
    $region22: #{tpu_custom_call.1} parent=1 // pred_check
      _
    $region23: #{tpu_custom_call.1} parent=1 // pred_check_branch
      %54 = sbr.rel (0) target = $region25
    $region24: #{tpu_custom_call.1} parent=1 // pred_region
      %55 = dma.done [#allocation3], 128
    $region25: #{tpu_custom_call.1} parent=1 // pred_fallthru
      _
    // Predicated region
    $region26: #{tpu_custom_call.1} parent=1 // pred_check
      _
    $region27: #{tpu_custom_call.1} parent=1 // pred_check_branch
      %57 = sbr.rel (0) target = $region29
    $region28: #{tpu_custom_call.1} parent=1 // pred_region
      %58 = dma.done [#allocation6], 256
    $region29: #{tpu_custom_call.1} parent=1 // pred_fallthru
      _
    // Predicated region
    $region30: #{tpu_custom_call.1} parent=1 // pred_check
      _
    $region31: #{tpu_custom_call.1} parent=1 // pred_check_branch
      %60 = sbr.rel (0) target = $region33
    $region32: #{tpu_custom_call.1} parent=1 // pred_region
      %61 = dma.done [#allocation6], 256
    $region33: #{tpu_custom_call.1} parent=1 // pred_fallthru
      _
    %v63 = vld [vmem:[#allocation2] sm:$0xf]
    %v64 = vld [vmem:[#allocation2 + $0x4] sm:$0xf]
    %v65 = vld [vmem:[#allocation5] sm:$0xf]
    %v66 = vld [vmem:[#allocation5 + $0x4] sm:$0xf]
    %v67 = vld [vmem:[#allocation5 + $0x8] sm:$0xf]
    %v68 = vld [vmem:[#allocation5 + $0xc] sm:$0xf]
    %v69 = vld [vmem:[#allocation7] sm:$0xf]
    %v70 = vld [vmem:[#allocation7 + $0x4] sm:$0xf]
    %v71 = vld [vmem:[#allocation7 + $0x8] sm:$0xf]
    %v72 = vld [vmem:[#allocation7 + $0xc] sm:$0xf]
    %v73 = vld [vmem:[%s2] sm:$0x1]
    %v74 = vld [vmem:[%s4] sm:$0x1]
    %v76 = vlaneseq
    %v77 = vshrl.u32 %v76, 7
    %v78 = vsub.s32 0, %v77
    %v79 = vrot.slane %v73, %v78
    %v83 = vunpack.c.l.b16 %v63
    %v84 = vunpack.c.l.b16 %v64
    %v85 = vpack.c.b16 %v84, %v83
    %v90 = vunpack.c.l.b16 %v65
    %v91 = vunpack.c.l.b16 %v66
    %v92 = vunpack.c.l.b16 %v67
    %v93 = vunpack.c.l.b16 %v68
    %v94 = vpack.c.b16 %v91, %v90
    %v95 = vpack.c.b16 %v93, %v92
    %vm98 = vcmask 261120
    %v100 = vsel %vm98, %v85, 0
    %102 = vmatprep.subr.bf16.mxu0 0
    %103 = vmatpush1.bf16.msra.mxu0 %v94
    %104 = vmatprep.subr.bf16.mxu0 0
    %105 = vmatpush1.bf16.msra.mxu0 %v95
    %106 = vmatprep.subr.bf16.mxu0 0
    %107 = vmatpush1.bf16.msra.mxu0 0
    %108 = vmatprep.subr.bf16.mxu0 0
    %109 = vmatpush1.bf16.msra.mxu0 0
    %110 = vmatprep.subr.bf16.mxu0 0
    %111 = vmatpush1.bf16.msra.mxu0 0
    %112 = vmatprep.subr.bf16.mxu0 0
    %113 = vmatpush1.bf16.msra.mxu0 0
    %114 = vmatprep.subr.bf16.mxu0 0
    %115 = vmatpush1.bf16.msra.mxu0 0
    %116 = vmatprep.subr.bf16.mxu0 0
    %117 = vmatpush1.bf16.msra.mxu0 0
    %118 = vmatprep.subr.bf16.mxu0 0
    %119 = vmatpush1.bf16.msra.mxu0 0
    %120 = vmatprep.subr.bf16.mxu0 0
    %121 = vmatpush1.bf16.msra.mxu0 0
    %122 = vmatprep.subr.bf16.mxu0 0
    %123 = vmatpush1.bf16.msra.mxu0 0
    %124 = vmatprep.subr.bf16.mxu0 0
    %125 = vmatpush1.bf16.msra.mxu0 0
    %126 = vmatprep.subr.bf16.mxu0 0
    %127 = vmatpush1.bf16.msra.mxu0 0
    %128 = vmatprep.subr.bf16.mxu0 0
    %129 = vmatpush1.bf16.msra.mxu0 0
    %130 = vmatprep.subr.bf16.mxu0 0
    %131 = vmatpush1.bf16.msra.mxu0 0
    %132 = vmatprep.subr.bf16.mxu0 0
    %133 = vmatpush1.bf16.msra.mxu0 0
    %134 = vmatprep.mubr.bf16.mxu0 0
    %135 = vmatmul.mubr.bf16.gmra.mrb[0].mxu0 %v100
    %v136 = vpop.f32.mrb[0].mxu0
    %v137 = vadd.f32 %v79, %v136
    %v138 = vpop.f32.mrb[0].mxu0
    %v139 = vpop.f32.mrb[0].mxu0
    %v140 = vadd.f32 %v79, %v139
    %v141 = vpop.f32.mrb[0].mxu0
    %142 = vdwg.mxu0
    %v143 = vpack.c.bf16 %v137, %v137
    %145 = vrot.lane.b32.xlu0 %v143, 120
    %v146 = vpop.permute.xlu0 %145
    %vm147 = vcmask 64512
    %v149 = vsel %vm147, %v143, 0
    %v152 = vsel %vm147, %v146, 0
    %154 = vmatprep.subr.bf16.mxu0 0
    %155 = vmatpush1.bf16.xpose.msra.mxu0 %v152
    %156 = vmatprep.subr.bf16.mxu0 0
    %157 = vmatpush1.bf16.xpose.msra.mxu0 0
    %158 = vmatprep.subr.bf16.mxu0 0
    %159 = vmatpush1.bf16.xpose.msra.mxu0 0
    %160 = vmatprep.subr.bf16.mxu0 0
    %161 = vmatpush1.bf16.xpose.msra.mxu0 0
    %162 = vmatprep.subr.bf16.mxu0 0
    %163 = vmatpush1.bf16.xpose.msra.mxu0 0
    %164 = vmatprep.subr.bf16.mxu0 0
    %165 = vmatpush1.bf16.xpose.msra.mxu0 0
    %166 = vmatprep.subr.bf16.mxu0 0
    %167 = vmatpush1.bf16.xpose.msra.mxu0 0
    %168 = vmatprep.subr.bf16.mxu0 0
    %169 = vmatpush1.bf16.xpose.msra.mxu0 0
    %170 = vmatprep.subr.bf16.mxu0 0
    %171 = vmatpush1.bf16.xpose.msra.mxu0 0
    %172 = vmatprep.subr.bf16.mxu0 0
    %173 = vmatpush1.bf16.xpose.msra.mxu0 0
    %174 = vmatprep.subr.bf16.mxu0 0
    %175 = vmatpush1.bf16.xpose.msra.mxu0 0
    %176 = vmatprep.subr.bf16.mxu0 0
    %177 = vmatpush1.bf16.xpose.msra.mxu0 0
    %178 = vmatprep.subr.bf16.mxu0 0
    %179 = vmatpush1.bf16.xpose.msra.mxu0 0
    %180 = vmatprep.subr.bf16.mxu0 0
    %181 = vmatpush1.bf16.xpose.msra.mxu0 0
    %182 = vmatprep.subr.bf16.mxu0 0
    %183 = vmatpush1.bf16.xpose.msra.mxu0 0
    %184 = vmatprep.subr.bf16.mxu0 0
    %185 = vmatpush1.bf16.xpose.msra.mxu0 0
    %186 = vmatprep.mubr.bf16.mxu0 0
    %187 = vmatmul.mubr.bf16.gmra.mrb[0].mxu0 %v149
    %v188 = vpop.f32.mrb[0].mxu0
    %v189 = vadd.f32 0.0, %v188
    %v190 = vpop.f32.mrb[0].mxu0
    %v191 = vpop.f32.mrb[0].mxu0
    %v192 = vpop.f32.mrb[0].mxu0
    %193 = vdwg.mxu0
    %v194 = vsel %vm147, %v189, -inf
    %195 = vmax.xlane.f32.xlu0 %v194
    %v196 = vpop.xlane.xlu0 %195
    %v197 = vsub.f32 %v189, %v196
    %v198 = vmul.f32 %v197, 1.442695
    %v199 = vpow.pop %v198
    %v200 = vsel %vm147, %v199, 0.0
    %201 = vadd.xlane.f32.xlu0 %v200
    %v202 = vpop.xlane.xlu0 %201
    %v203 = vrcp.pop %v202
    %v204 = vmul.f32 %v199, %v203
    %v205 = vpack.c.bf16 %v204, %v204
    %206 = vrot.lane.b32.xlu0 %v143, 112
    %v207 = vpop.permute.xlu0 %206
    %v209 = vsel %vm147, %v205, 0
    %vm211 = vcmask 1043456
    %v213 = vsel %vm211, %v207, 0
    %215 = vmatprep.subr.bf16.mxu0 0
    %216 = vmatpush1.bf16.msra.mxu0 %v213
    %217 = vmatprep.subr.bf16.mxu0 0
    %218 = vmatpush1.bf16.msra.mxu0 0
    %219 = vmatprep.subr.bf16.mxu0 0
    %220 = vmatpush1.bf16.msra.mxu0 0
    %221 = vmatprep.subr.bf16.mxu0 0
    %222 = vmatpush1.bf16.msra.mxu0 0
    %223 = vmatprep.subr.bf16.mxu0 0
    %224 = vmatpush1.bf16.msra.mxu0 0
    %225 = vmatprep.subr.bf16.mxu0 0
    %226 = vmatpush1.bf16.msra.mxu0 0
    %227 = vmatprep.subr.bf16.mxu0 0
    %228 = vmatpush1.bf16.msra.mxu0 0
    %229 = vmatprep.subr.bf16.mxu0 0
    %230 = vmatpush1.bf16.msra.mxu0 0
    %231 = vmatprep.subr.bf16.mxu0 0
    %232 = vmatpush1.bf16.msra.mxu0 0
    %233 = vmatprep.subr.bf16.mxu0 0
    %234 = vmatpush1.bf16.msra.mxu0 0
    %235 = vmatprep.subr.bf16.mxu0 0
    %236 = vmatpush1.bf16.msra.mxu0 0
    %237 = vmatprep.subr.bf16.mxu0 0
    %238 = vmatpush1.bf16.msra.mxu0 0
    %239 = vmatprep.subr.bf16.mxu0 0
    %240 = vmatpush1.bf16.msra.mxu0 0
    %241 = vmatprep.subr.bf16.mxu0 0
    %242 = vmatpush1.bf16.msra.mxu0 0
    %243 = vmatprep.subr.bf16.mxu0 0
    %244 = vmatpush1.bf16.msra.mxu0 0
    %245 = vmatprep.subr.bf16.mxu0 0
    %246 = vmatpush1.bf16.msra.mxu0 0
    %247 = vmatprep.mubr.bf16.mxu0 0
    %248 = vmatmul.mubr.bf16.gmra.mrb[0].mxu0 %v209
    %v249 = vpop.f32.mrb[0].mxu0
    %v250 = vadd.f32 0.0, %v249
    %v251 = vpop.f32.mrb[0].mxu0
    %v252 = vpop.f32.mrb[0].mxu0
    %v253 = vpop.f32.mrb[0].mxu0
    %254 = vdwg.mxu0
    %v255 = vpack.c.bf16 %v250, %v250
    %256 = vrot.lane.b32.xlu0 %v143, 104
    %v257 = vpop.permute.xlu0 %256
    %258 = vrot.lane.b32.xlu0 %v143, 96
    %v259 = vpop.permute.xlu0 %258
    %v261 = vsel %vm147, %v257, 0
    %v264 = vsel %vm147, %v259, 0
    %266 = vmatprep.subr.bf16.mxu0 0
    %267 = vmatpush1.bf16.xpose.msra.mxu0 %v264
    %268 = vmatprep.subr.bf16.mxu0 0
    %269 = vmatpush1.bf16.xpose.msra.mxu0 0
    %270 = vmatprep.subr.bf16.mxu0 0
    %271 = vmatpush1.bf16.xpose.msra.mxu0 0
    %272 = vmatprep.subr.bf16.mxu0 0
    %273 = vmatpush1.bf16.xpose.msra.mxu0 0
    %274 = vmatprep.subr.bf16.mxu0 0
    %275 = vmatpush1.bf16.xpose.msra.mxu0 0
    %276 = vmatprep.subr.bf16.mxu0 0
    %277 = vmatpush1.bf16.xpose.msra.mxu0 0
    %278 = vmatprep.subr.bf16.mxu0 0
    %279 = vmatpush1.bf16.xpose.msra.mxu0 0
    %280 = vmatprep.subr.bf16.mxu0 0
    %281 = vmatpush1.bf16.xpose.msra.mxu0 0
    %282 = vmatprep.subr.bf16.mxu0 0
    %283 = vmatpush1.bf16.xpose.msra.mxu0 0
    %284 = vmatprep.subr.bf16.mxu0 0
    %285 = vmatpush1.bf16.xpose.msra.mxu0 0
    %286 = vmatprep.subr.bf16.mxu0 0
    %287 = vmatpush1.bf16.xpose.msra.mxu0 0
    %288 = vmatprep.subr.bf16.mxu0 0
    %289 = vmatpush1.bf16.xpose.msra.mxu0 0
    %290 = vmatprep.subr.bf16.mxu0 0
    %291 = vmatpush1.bf16.xpose.msra.mxu0 0
    %292 = vmatprep.subr.bf16.mxu0 0
    %293 = vmatpush1.bf16.xpose.msra.mxu0 0
    %294 = vmatprep.subr.bf16.mxu0 0
    %295 = vmatpush1.bf16.xpose.msra.mxu0 0
    %296 = vmatprep.subr.bf16.mxu0 0
    %297 = vmatpush1.bf16.xpose.msra.mxu0 0
    %298 = vmatprep.mubr.bf16.mxu0 0
    %299 = vmatmul.mubr.bf16.gmra.mrb[0].mxu0 %v261
    %v300 = vpop.f32.mrb[0].mxu0
    %v301 = vadd.f32 0.0, %v300
    %v302 = vpop.f32.mrb[0].mxu0
    %v303 = vpop.f32.mrb[0].mxu0
    %v304 = vpop.f32.mrb[0].mxu0
    %305 = vdwg.mxu0
    %v306 = vsel %vm147, %v301, -inf
    %307 = vmax.xlane.f32.xlu0 %v306
    %v308 = vpop.xlane.xlu0 %307
    %v309 = vsub.f32 %v301, %v308
    %v310 = vmul.f32 %v309, 1.442695
    %v311 = vpow.pop %v310
    %v312 = vsel %vm147, %v311, 0.0
    %313 = vadd.xlane.f32.xlu0 %v312
    %v314 = vpop.xlane.xlu0 %313
    %v315 = vrcp.pop %v314
    %v316 = vmul.f32 %v311, %v315
    %v317 = vpack.c.bf16 %v316, %v316
    %318 = vrot.lane.b32.xlu0 %v143, 88
    %v319 = vpop.permute.xlu0 %318
    %v321 = vsel %vm147, %v317, 0
    %v324 = vsel %vm211, %v319, 0
    %326 = vmatprep.subr.bf16.mxu0 0
    %327 = vmatpush1.bf16.msra.mxu0 %v324
    %328 = vmatprep.subr.bf16.mxu0 0
    %329 = vmatpush1.bf16.msra.mxu0 0
    %330 = vmatprep.subr.bf16.mxu0 0
    %331 = vmatpush1.bf16.msra.mxu0 0
    %332 = vmatprep.subr.bf16.mxu0 0
    %333 = vmatpush1.bf16.msra.mxu0 0
    %334 = vmatprep.subr.bf16.mxu0 0
    %335 = vmatpush1.bf16.msra.mxu0 0
    %336 = vmatprep.subr.bf16.mxu0 0
    %337 = vmatpush1.bf16.msra.mxu0 0
    %338 = vmatprep.subr.bf16.mxu0 0
    %339 = vmatpush1.bf16.msra.mxu0 0
    %340 = vmatprep.subr.bf16.mxu0 0
    %341 = vmatpush1.bf16.msra.mxu0 0
    %342 = vmatprep.subr.bf16.mxu0 0
    %343 = vmatpush1.bf16.msra.mxu0 0
    %344 = vmatprep.subr.bf16.mxu0 0
    %345 = vmatpush1.bf16.msra.mxu0 0
    %346 = vmatprep.subr.bf16.mxu0 0
    %347 = vmatpush1.bf16.msra.mxu0 0
    %348 = vmatprep.subr.bf16.mxu0 0
    %349 = vmatpush1.bf16.msra.mxu0 0
    %350 = vmatprep.subr.bf16.mxu0 0
    %351 = vmatpush1.bf16.msra.mxu0 0
    %352 = vmatprep.subr.bf16.mxu0 0
    %353 = vmatpush1.bf16.msra.mxu0 0
    %354 = vmatprep.subr.bf16.mxu0 0
    %355 = vmatpush1.bf16.msra.mxu0 0
    %356 = vmatprep.subr.bf16.mxu0 0
    %357 = vmatpush1.bf16.msra.mxu0 0
    %358 = vmatprep.mubr.bf16.mxu0 0
    %359 = vmatmul.mubr.bf16.gmra.mrb[0].mxu0 %v321
    %v360 = vpop.f32.mrb[0].mxu0
    %v361 = vadd.f32 0.0, %v360
    %v362 = vpop.f32.mrb[0].mxu0
    %v363 = vpop.f32.mrb[0].mxu0
    %v364 = vpop.f32.mrb[0].mxu0
    %365 = vdwg.mxu0
    %v366 = vpack.c.bf16 %v361, %v361
    %v368 = vsel %vm147, %v366, 0
    %v371 = vsel %vm211, %v70, 0
    %373 = vmatprep.subr.bf16.mxu0 0
    %374 = vmatpush1.bf16.msra.mxu0 %v371
    %375 = vmatprep.subr.bf16.mxu0 0
    %376 = vmatpush1.bf16.msra.mxu0 0
    %377 = vmatprep.subr.bf16.mxu0 0
    %378 = vmatpush1.bf16.msra.mxu0 0
    %379 = vmatprep.subr.bf16.mxu0 0
    %380 = vmatpush1.bf16.msra.mxu0 0
    %381 = vmatprep.subr.bf16.mxu0 0
    %382 = vmatpush1.bf16.msra.mxu0 0
    %383 = vmatprep.subr.bf16.mxu0 0
    %384 = vmatpush1.bf16.msra.mxu0 0
    %385 = vmatprep.subr.bf16.mxu0 0
    %386 = vmatpush1.bf16.msra.mxu0 0
    %387 = vmatprep.subr.bf16.mxu0 0
    %388 = vmatpush1.bf16.msra.mxu0 0
    %389 = vmatprep.subr.bf16.mxu0 0
    %390 = vmatpush1.bf16.msra.mxu0 0
    %391 = vmatprep.subr.bf16.mxu0 0
    %392 = vmatpush1.bf16.msra.mxu0 0
    %393 = vmatprep.subr.bf16.mxu0 0
    %394 = vmatpush1.bf16.msra.mxu0 0
    %395 = vmatprep.subr.bf16.mxu0 0
    %396 = vmatpush1.bf16.msra.mxu0 0
    %397 = vmatprep.subr.bf16.mxu0 0
    %398 = vmatpush1.bf16.msra.mxu0 0
    %399 = vmatprep.subr.bf16.mxu0 0
    %400 = vmatpush1.bf16.msra.mxu0 0
    %401 = vmatprep.subr.bf16.mxu0 0
    %402 = vmatpush1.bf16.msra.mxu0 0
    %403 = vmatprep.subr.bf16.mxu0 0
    %404 = vmatpush1.bf16.msra.mxu0 0
    %405 = vmatprep.mubr.bf16.mxu0 0
    %406 = vmatmul.mubr.bf16.gmra.mrb[0].mxu0 %v368
    %v407 = vpop.f32.mrb[0].mxu0
    %v408 = vadd.f32 0.0, %v407
    %v409 = vpop.f32.mrb[0].mxu0
    %v410 = vpop.f32.mrb[0].mxu0
    %v411 = vpop.f32.mrb[0].mxu0
    %412 = vdwg.mxu0
    %v414 = vsel %vm147, %v255, 0
    %v417 = vsel %vm211, %v69, 0
    %419 = vmatprep.subr.bf16.mxu0 0
    %420 = vmatpush1.bf16.msra.mxu0 %v417
    %421 = vmatprep.subr.bf16.mxu0 0
    %422 = vmatpush1.bf16.msra.mxu0 0
    %423 = vmatprep.subr.bf16.mxu0 0
    %424 = vmatpush1.bf16.msra.mxu0 0
    %425 = vmatprep.subr.bf16.mxu0 0
    %426 = vmatpush1.bf16.msra.mxu0 0
    %427 = vmatprep.subr.bf16.mxu0 0
    %428 = vmatpush1.bf16.msra.mxu0 0
    %429 = vmatprep.subr.bf16.mxu0 0
    %430 = vmatpush1.bf16.msra.mxu0 0
    %431 = vmatprep.subr.bf16.mxu0 0
    %432 = vmatpush1.bf16.msra.mxu0 0
    %433 = vmatprep.subr.bf16.mxu0 0
    %434 = vmatpush1.bf16.msra.mxu0 0
    %435 = vmatprep.subr.bf16.mxu0 0
    %436 = vmatpush1.bf16.msra.mxu0 0
    %437 = vmatprep.subr.bf16.mxu0 0
    %438 = vmatpush1.bf16.msra.mxu0 0
    %439 = vmatprep.subr.bf16.mxu0 0
    %440 = vmatpush1.bf16.msra.mxu0 0
    %441 = vmatprep.subr.bf16.mxu0 0
    %442 = vmatpush1.bf16.msra.mxu0 0
    %443 = vmatprep.subr.bf16.mxu0 0
    %444 = vmatpush1.bf16.msra.mxu0 0
    %445 = vmatprep.subr.bf16.mxu0 0
    %446 = vmatpush1.bf16.msra.mxu0 0
    %447 = vmatprep.subr.bf16.mxu0 0
    %448 = vmatpush1.bf16.msra.mxu0 0
    %449 = vmatprep.subr.bf16.mxu0 0
    %450 = vmatpush1.bf16.msra.mxu0 0
    %451 = vmatprep.mubr.bf16.mxu0 0
    %452 = vmatmul.mubr.bf16.gmra.mrb[0].mxu0 %v414
    %v453 = vpop.f32.mrb[0].mxu0
    %v454 = vadd.f32 %v408, %v453
    %v455 = vpop.f32.mrb[0].mxu0
    %v456 = vpop.f32.mrb[0].mxu0
    %v457 = vpop.f32.mrb[0].mxu0
    %458 = vdwg.mxu0
    %459 = vrot.lane.b32.xlu0 %v143, 80
    %v460 = vpop.permute.xlu0 %459
    %461 = vrot.lane.b32.xlu0 %v143, 72
    %v462 = vpop.permute.xlu0 %461
    %v464 = vsel %vm147, %v460, 0
    %v467 = vsel %vm147, %v462, 0
    %469 = vmatprep.subr.bf16.mxu0 0
    %470 = vmatpush1.bf16.xpose.msra.mxu0 %v467
    %471 = vmatprep.subr.bf16.mxu0 0
    %472 = vmatpush1.bf16.xpose.msra.mxu0 0
    %473 = vmatprep.subr.bf16.mxu0 0
    %474 = vmatpush1.bf16.xpose.msra.mxu0 0
    %475 = vmatprep.subr.bf16.mxu0 0
    %476 = vmatpush1.bf16.xpose.msra.mxu0 0
    %477 = vmatprep.subr.bf16.mxu0 0
    %478 = vmatpush1.bf16.xpose.msra.mxu0 0
    %479 = vmatprep.subr.bf16.mxu0 0
    %480 = vmatpush1.bf16.xpose.msra.mxu0 0
    %481 = vmatprep.subr.bf16.mxu0 0
    %482 = vmatpush1.bf16.xpose.msra.mxu0 0
    %483 = vmatprep.subr.bf16.mxu0 0
    %484 = vmatpush1.bf16.xpose.msra.mxu0 0
    %485 = vmatprep.subr.bf16.mxu0 0
    %486 = vmatpush1.bf16.xpose.msra.mxu0 0
    %487 = vmatprep.subr.bf16.mxu0 0
    %488 = vmatpush1.bf16.xpose.msra.mxu0 0
    %489 = vmatprep.subr.bf16.mxu0 0
    %490 = vmatpush1.bf16.xpose.msra.mxu0 0
    %491 = vmatprep.subr.bf16.mxu0 0
    %492 = vmatpush1.bf16.xpose.msra.mxu0 0
    %493 = vmatprep.subr.bf16.mxu0 0
    %494 = vmatpush1.bf16.xpose.msra.mxu0 0
    %495 = vmatprep.subr.bf16.mxu0 0
    %496 = vmatpush1.bf16.xpose.msra.mxu0 0
    %497 = vmatprep.subr.bf16.mxu0 0
    %498 = vmatpush1.bf16.xpose.msra.mxu0 0
    %499 = vmatprep.subr.bf16.mxu0 0
    %500 = vmatpush1.bf16.xpose.msra.mxu0 0
    %501 = vmatprep.mubr.bf16.mxu0 0
    %502 = vmatmul.mubr.bf16.gmra.mrb[0].mxu0 %v464
    %v503 = vpop.f32.mrb[0].mxu0
    %v504 = vadd.f32 0.0, %v503
    %v505 = vpop.f32.mrb[0].mxu0
    %v506 = vpop.f32.mrb[0].mxu0
    %v507 = vpop.f32.mrb[0].mxu0
    %508 = vdwg.mxu0
    %v509 = vsel %vm147, %v504, -inf
    %510 = vmax.xlane.f32.xlu0 %v509
    %v511 = vpop.xlane.xlu0 %510
    %v512 = vsub.f32 %v504, %v511
    %v513 = vmul.f32 %v512, 1.442695
    %v514 = vpow.pop %v513
    %v515 = vsel %vm147, %v514, 0.0
    %516 = vadd.xlane.f32.xlu0 %v515
    %v517 = vpop.xlane.xlu0 %516
    %v518 = vrcp.pop %v517
    %v519 = vmul.f32 %v514, %v518
    %v520 = vpack.c.bf16 %v519, %v519
    %521 = vrot.lane.b32.xlu0 %v143, 64
    %v522 = vpop.permute.xlu0 %521
    %v524 = vsel %vm147, %v520, 0
    %v527 = vsel %vm211, %v522, 0
    %529 = vmatprep.subr.bf16.mxu0 0
    %530 = vmatpush1.bf16.msra.mxu0 %v527
    %531 = vmatprep.subr.bf16.mxu0 0
    %532 = vmatpush1.bf16.msra.mxu0 0
    %533 = vmatprep.subr.bf16.mxu0 0
    %534 = vmatpush1.bf16.msra.mxu0 0
    %535 = vmatprep.subr.bf16.mxu0 0
    %536 = vmatpush1.bf16.msra.mxu0 0
    %537 = vmatprep.subr.bf16.mxu0 0
    %538 = vmatpush1.bf16.msra.mxu0 0
    %539 = vmatprep.subr.bf16.mxu0 0
    %540 = vmatpush1.bf16.msra.mxu0 0
    %541 = vmatprep.subr.bf16.mxu0 0
    %542 = vmatpush1.bf16.msra.mxu0 0
    %543 = vmatprep.subr.bf16.mxu0 0
    %544 = vmatpush1.bf16.msra.mxu0 0
    %545 = vmatprep.subr.bf16.mxu0 0
    %546 = vmatpush1.bf16.msra.mxu0 0
    %547 = vmatprep.subr.bf16.mxu0 0
    %548 = vmatpush1.bf16.msra.mxu0 0
    %549 = vmatprep.subr.bf16.mxu0 0
    %550 = vmatpush1.bf16.msra.mxu0 0
    %551 = vmatprep.subr.bf16.mxu0 0
    %552 = vmatpush1.bf16.msra.mxu0 0
    %553 = vmatprep.subr.bf16.mxu0 0
    %554 = vmatpush1.bf16.msra.mxu0 0
    %555 = vmatprep.subr.bf16.mxu0 0
    %556 = vmatpush1.bf16.msra.mxu0 0
    %557 = vmatprep.subr.bf16.mxu0 0
    %558 = vmatpush1.bf16.msra.mxu0 0
    %559 = vmatprep.subr.bf16.mxu0 0
    %560 = vmatpush1.bf16.msra.mxu0 0
    %561 = vmatprep.mubr.bf16.mxu0 0
    %562 = vmatmul.mubr.bf16.gmra.mrb[0].mxu0 %v524
    %v563 = vpop.f32.mrb[0].mxu0
    %v564 = vadd.f32 0.0, %v563
    %v565 = vpop.f32.mrb[0].mxu0
    %v566 = vpop.f32.mrb[0].mxu0
    %v567 = vpop.f32.mrb[0].mxu0
    %568 = vdwg.mxu0
    %v569 = vpack.c.bf16 %v564, %v564
    %v571 = vsel %vm147, %v569, 0
    %v574 = vsel %vm211, %v71, 0
    %576 = vmatprep.subr.bf16.mxu0 0
    %577 = vmatpush1.bf16.msra.mxu0 %v574
    %578 = vmatprep.subr.bf16.mxu0 0
    %579 = vmatpush1.bf16.msra.mxu0 0
    %580 = vmatprep.subr.bf16.mxu0 0
    %581 = vmatpush1.bf16.msra.mxu0 0
    %582 = vmatprep.subr.bf16.mxu0 0
    %583 = vmatpush1.bf16.msra.mxu0 0
    %584 = vmatprep.subr.bf16.mxu0 0
    %585 = vmatpush1.bf16.msra.mxu0 0
    %586 = vmatprep.subr.bf16.mxu0 0
    %587 = vmatpush1.bf16.msra.mxu0 0
    %588 = vmatprep.subr.bf16.mxu0 0
    %589 = vmatpush1.bf16.msra.mxu0 0
    %590 = vmatprep.subr.bf16.mxu0 0
    %591 = vmatpush1.bf16.msra.mxu0 0
    %592 = vmatprep.subr.bf16.mxu0 0
    %593 = vmatpush1.bf16.msra.mxu0 0
    %594 = vmatprep.subr.bf16.mxu0 0
    %595 = vmatpush1.bf16.msra.mxu0 0
    %596 = vmatprep.subr.bf16.mxu0 0
    %597 = vmatpush1.bf16.msra.mxu0 0
    %598 = vmatprep.subr.bf16.mxu0 0
    %599 = vmatpush1.bf16.msra.mxu0 0
    %600 = vmatprep.subr.bf16.mxu0 0
    %601 = vmatpush1.bf16.msra.mxu0 0
    %602 = vmatprep.subr.bf16.mxu0 0
    %603 = vmatpush1.bf16.msra.mxu0 0
    %604 = vmatprep.subr.bf16.mxu0 0
    %605 = vmatpush1.bf16.msra.mxu0 0
    %606 = vmatprep.subr.bf16.mxu0 0
    %607 = vmatpush1.bf16.msra.mxu0 0
    %608 = vmatprep.mubr.bf16.mxu0 0
    %609 = vmatmul.mubr.bf16.gmra.mrb[0].mxu0 %v571
    %v610 = vpop.f32.mrb[0].mxu0
    %v611 = vadd.f32 0.0, %v610
    %v612 = vpop.f32.mrb[0].mxu0
    %v613 = vpop.f32.mrb[0].mxu0
    %v614 = vpop.f32.mrb[0].mxu0
    %615 = vdwg.mxu0
    %v616 = vadd.f32 %v454, %v611
    %617 = vrot.lane.b32.xlu0 %v143, 56
    %v618 = vpop.permute.xlu0 %617
    %619 = vrot.lane.b32.xlu0 %v143, 48
    %v620 = vpop.permute.xlu0 %619
    %v622 = vsel %vm147, %v618, 0
    %v625 = vsel %vm147, %v620, 0
    %627 = vmatprep.subr.bf16.mxu0 0
    %628 = vmatpush1.bf16.xpose.msra.mxu0 %v625
    %629 = vmatprep.subr.bf16.mxu0 0
    %630 = vmatpush1.bf16.xpose.msra.mxu0 0
    %631 = vmatprep.subr.bf16.mxu0 0
    %632 = vmatpush1.bf16.xpose.msra.mxu0 0
    %633 = vmatprep.subr.bf16.mxu0 0
    %634 = vmatpush1.bf16.xpose.msra.mxu0 0
    %635 = vmatprep.subr.bf16.mxu0 0
    %636 = vmatpush1.bf16.xpose.msra.mxu0 0
    %637 = vmatprep.subr.bf16.mxu0 0
    %638 = vmatpush1.bf16.xpose.msra.mxu0 0
    %639 = vmatprep.subr.bf16.mxu0 0
    %640 = vmatpush1.bf16.xpose.msra.mxu0 0
    %641 = vmatprep.subr.bf16.mxu0 0
    %642 = vmatpush1.bf16.xpose.msra.mxu0 0
    %643 = vmatprep.subr.bf16.mxu0 0
    %644 = vmatpush1.bf16.xpose.msra.mxu0 0
    %645 = vmatprep.subr.bf16.mxu0 0
    %646 = vmatpush1.bf16.xpose.msra.mxu0 0
    %647 = vmatprep.subr.bf16.mxu0 0
    %648 = vmatpush1.bf16.xpose.msra.mxu0 0
    %649 = vmatprep.subr.bf16.mxu0 0
    %650 = vmatpush1.bf16.xpose.msra.mxu0 0
    %651 = vmatprep.subr.bf16.mxu0 0
    %652 = vmatpush1.bf16.xpose.msra.mxu0 0
    %653 = vmatprep.subr.bf16.mxu0 0
    %654 = vmatpush1.bf16.xpose.msra.mxu0 0
    %655 = vmatprep.subr.bf16.mxu0 0
    %656 = vmatpush1.bf16.xpose.msra.mxu0 0
    %657 = vmatprep.subr.bf16.mxu0 0
    %658 = vmatpush1.bf16.xpose.msra.mxu0 0
    %659 = vmatprep.mubr.bf16.mxu0 0
    %660 = vmatmul.mubr.bf16.gmra.mrb[0].mxu0 %v622
    %v661 = vpop.f32.mrb[0].mxu0
    %v662 = vadd.f32 0.0, %v661
    %v663 = vpop.f32.mrb[0].mxu0
    %v664 = vpop.f32.mrb[0].mxu0
    %v665 = vpop.f32.mrb[0].mxu0
    %666 = vdwg.mxu0
    %v667 = vsel %vm147, %v662, -inf
    %668 = vmax.xlane.f32.xlu0 %v667
    %v669 = vpop.xlane.xlu0 %668
    %v670 = vsub.f32 %v662, %v669
    %v671 = vmul.f32 %v670, 1.442695
    %v672 = vpow.pop %v671
    %v673 = vsel %vm147, %v672, 0.0
    %674 = vadd.xlane.f32.xlu0 %v673
    %v675 = vpop.xlane.xlu0 %674
    %v676 = vrcp.pop %v675
    %v677 = vmul.f32 %v672, %v676
    %v678 = vpack.c.bf16 %v677, %v677
    %679 = vrot.lane.b32.xlu0 %v143, 40
    %v680 = vpop.permute.xlu0 %679
    %v682 = vsel %vm147, %v678, 0
    %v685 = vsel %vm211, %v680, 0
    %687 = vmatprep.subr.bf16.mxu0 0
    %688 = vmatpush1.bf16.msra.mxu0 %v685
    %689 = vmatprep.subr.bf16.mxu0 0
    %690 = vmatpush1.bf16.msra.mxu0 0
    %691 = vmatprep.subr.bf16.mxu0 0
    %692 = vmatpush1.bf16.msra.mxu0 0
    %693 = vmatprep.subr.bf16.mxu0 0
    %694 = vmatpush1.bf16.msra.mxu0 0
    %695 = vmatprep.subr.bf16.mxu0 0
    %696 = vmatpush1.bf16.msra.mxu0 0
    %697 = vmatprep.subr.bf16.mxu0 0
    %698 = vmatpush1.bf16.msra.mxu0 0
    %699 = vmatprep.subr.bf16.mxu0 0
    %700 = vmatpush1.bf16.msra.mxu0 0
    %701 = vmatprep.subr.bf16.mxu0 0
    %702 = vmatpush1.bf16.msra.mxu0 0
    %703 = vmatprep.subr.bf16.mxu0 0
    %704 = vmatpush1.bf16.msra.mxu0 0
    %705 = vmatprep.subr.bf16.mxu0 0
    %706 = vmatpush1.bf16.msra.mxu0 0
    %707 = vmatprep.subr.bf16.mxu0 0
    %708 = vmatpush1.bf16.msra.mxu0 0
    %709 = vmatprep.subr.bf16.mxu0 0
    %710 = vmatpush1.bf16.msra.mxu0 0
    %711 = vmatprep.subr.bf16.mxu0 0
    %712 = vmatpush1.bf16.msra.mxu0 0
    %713 = vmatprep.subr.bf16.mxu0 0
    %714 = vmatpush1.bf16.msra.mxu0 0
    %715 = vmatprep.subr.bf16.mxu0 0
    %716 = vmatpush1.bf16.msra.mxu0 0
    %717 = vmatprep.subr.bf16.mxu0 0
    %718 = vmatpush1.bf16.msra.mxu0 0
    %719 = vmatprep.mubr.bf16.mxu0 0
    %720 = vmatmul.mubr.bf16.gmra.mrb[0].mxu0 %v682
    %v721 = vpop.f32.mrb[0].mxu0
    %v722 = vadd.f32 0.0, %v721
    %v723 = vpop.f32.mrb[0].mxu0
    %v724 = vpop.f32.mrb[0].mxu0
    %v725 = vpop.f32.mrb[0].mxu0
    %726 = vdwg.mxu0
    %v727 = vpack.c.bf16 %v722, %v722
    %v729 = vsel %vm147, %v727, 0
    %v732 = vsel %vm211, %v72, 0
    %734 = vmatprep.subr.bf16.mxu0 0
    %735 = vmatpush1.bf16.msra.mxu0 %v732
    %736 = vmatprep.subr.bf16.mxu0 0
    %737 = vmatpush1.bf16.msra.mxu0 0
    %738 = vmatprep.subr.bf16.mxu0 0
    %739 = vmatpush1.bf16.msra.mxu0 0
    %740 = vmatprep.subr.bf16.mxu0 0
    %741 = vmatpush1.bf16.msra.mxu0 0
    %742 = vmatprep.subr.bf16.mxu0 0
    %743 = vmatpush1.bf16.msra.mxu0 0
    %744 = vmatprep.subr.bf16.mxu0 0
    %745 = vmatpush1.bf16.msra.mxu0 0
    %746 = vmatprep.subr.bf16.mxu0 0
    %747 = vmatpush1.bf16.msra.mxu0 0
    %748 = vmatprep.subr.bf16.mxu0 0
    %749 = vmatpush1.bf16.msra.mxu0 0
    %750 = vmatprep.subr.bf16.mxu0 0
    %751 = vmatpush1.bf16.msra.mxu0 0
    %752 = vmatprep.subr.bf16.mxu0 0
    %753 = vmatpush1.bf16.msra.mxu0 0
    %754 = vmatprep.subr.bf16.mxu0 0
    %755 = vmatpush1.bf16.msra.mxu0 0
    %756 = vmatprep.subr.bf16.mxu0 0
    %757 = vmatpush1.bf16.msra.mxu0 0
    %758 = vmatprep.subr.bf16.mxu0 0
    %759 = vmatpush1.bf16.msra.mxu0 0
    %760 = vmatprep.subr.bf16.mxu0 0
    %761 = vmatpush1.bf16.msra.mxu0 0
    %762 = vmatprep.subr.bf16.mxu0 0
    %763 = vmatpush1.bf16.msra.mxu0 0
    %764 = vmatprep.subr.bf16.mxu0 0
    %765 = vmatpush1.bf16.msra.mxu0 0
    %766 = vmatprep.mubr.bf16.mxu0 0
    %767 = vmatmul.mubr.bf16.gmra.mrb[0].mxu0 %v729
    %v768 = vpop.f32.mrb[0].mxu0
    %v769 = vadd.f32 0.0, %v768
    %v770 = vpop.f32.mrb[0].mxu0
    %v771 = vpop.f32.mrb[0].mxu0
    %v772 = vpop.f32.mrb[0].mxu0
    %773 = vdwg.mxu0
    %v774 = vadd.f32 %v616, %v769
    %v776 = vlaneseq
    %v777 = vshrl.u32 %v776, 7
    %v778 = vsub.s32 0, %v777
    %v779 = vrot.slane %v74, %v778
    %v781 = vadd.f32 %v774, %v779
    %782 = vst.msk [vmem:[#allocation8] sm:$0xff] %vm98, %v781
    %v783 = vpack.c.bf16 %v140, %v140
    %785 = vrot.lane.b32.xlu0 %v783, 120
    %v786 = vpop.permute.xlu0 %785
    %v788 = vsel %vm147, %v783, 0
    %v791 = vsel %vm147, %v786, 0
    %793 = vmatprep.subr.bf16.mxu0 0
    %794 = vmatpush1.bf16.xpose.msra.mxu0 %v791
    %795 = vmatprep.subr.bf16.mxu0 0
    %796 = vmatpush1.bf16.xpose.msra.mxu0 0
    %797 = vmatprep.subr.bf16.mxu0 0
    %798 = vmatpush1.bf16.xpose.msra.mxu0 0
    %799 = vmatprep.subr.bf16.mxu0 0
    %800 = vmatpush1.bf16.xpose.msra.mxu0 0
    %801 = vmatprep.subr.bf16.mxu0 0
    %802 = vmatpush1.bf16.xpose.msra.mxu0 0
    %803 = vmatprep.subr.bf16.mxu0 0
    %804 = vmatpush1.bf16.xpose.msra.mxu0 0
    %805 = vmatprep.subr.bf16.mxu0 0
    %806 = vmatpush1.bf16.xpose.msra.mxu0 0
    %807 = vmatprep.subr.bf16.mxu0 0
    %808 = vmatpush1.bf16.xpose.msra.mxu0 0
    %809 = vmatprep.subr.bf16.mxu0 0
    %810 = vmatpush1.bf16.xpose.msra.mxu0 0
    %811 = vmatprep.subr.bf16.mxu0 0
    %812 = vmatpush1.bf16.xpose.msra.mxu0 0
    %813 = vmatprep.subr.bf16.mxu0 0
    %814 = vmatpush1.bf16.xpose.msra.mxu0 0
    %815 = vmatprep.subr.bf16.mxu0 0
    %816 = vmatpush1.bf16.xpose.msra.mxu0 0
    %817 = vmatprep.subr.bf16.mxu0 0
    %818 = vmatpush1.bf16.xpose.msra.mxu0 0
    %819 = vmatprep.subr.bf16.mxu0 0
    %820 = vmatpush1.bf16.xpose.msra.mxu0 0
    %821 = vmatprep.subr.bf16.mxu0 0
    %822 = vmatpush1.bf16.xpose.msra.mxu0 0
    %823 = vmatprep.subr.bf16.mxu0 0
    %824 = vmatpush1.bf16.xpose.msra.mxu0 0
    %825 = vmatprep.mubr.bf16.mxu0 0
    %826 = vmatmul.mubr.bf16.gmra.mrb[0].mxu0 %v788
    %v827 = vpop.f32.mrb[0].mxu0
    %v828 = vadd.f32 0.0, %v827
    %v829 = vpop.f32.mrb[0].mxu0
    %v830 = vpop.f32.mrb[0].mxu0
    %v831 = vpop.f32.mrb[0].mxu0
    %832 = vdwg.mxu0
    %v833 = vsel %vm147, %v828, -inf
    %834 = vmax.xlane.f32.xlu0 %v833
    %v835 = vpop.xlane.xlu0 %834
    %v836 = vsub.f32 %v828, %v835
    %v837 = vmul.f32 %v836, 1.442695
    %v838 = vpow.pop %v837
    %v839 = vsel %vm147, %v838, 0.0
    %840 = vadd.xlane.f32.xlu0 %v839
    %v841 = vpop.xlane.xlu0 %840
    %v842 = vrcp.pop %v841
    %v843 = vmul.f32 %v838, %v842
    %v844 = vpack.c.bf16 %v843, %v843
    %845 = vrot.lane.b32.xlu0 %v783, 112
    %v846 = vpop.permute.xlu0 %845
    %v848 = vsel %vm147, %v844, 0
    %v851 = vsel %vm211, %v846, 0
    %853 = vmatprep.subr.bf16.mxu0 0
    %854 = vmatpush1.bf16.msra.mxu0 %v851
    %855 = vmatprep.subr.bf16.mxu0 0
    %856 = vmatpush1.bf16.msra.mxu0 0
    %857 = vmatprep.subr.bf16.mxu0 0
    %858 = vmatpush1.bf16.msra.mxu0 0
    %859 = vmatprep.subr.bf16.mxu0 0
    %860 = vmatpush1.bf16.msra.mxu0 0
    %861 = vmatprep.subr.bf16.mxu0 0
    %862 = vmatpush1.bf16.msra.mxu0 0
    %863 = vmatprep.subr.bf16.mxu0 0
    %864 = vmatpush1.bf16.msra.mxu0 0
    %865 = vmatprep.subr.bf16.mxu0 0
    %866 = vmatpush1.bf16.msra.mxu0 0
    %867 = vmatprep.subr.bf16.mxu0 0
    %868 = vmatpush1.bf16.msra.mxu0 0
    %869 = vmatprep.subr.bf16.mxu0 0
    %870 = vmatpush1.bf16.msra.mxu0 0
    %871 = vmatprep.subr.bf16.mxu0 0
    %872 = vmatpush1.bf16.msra.mxu0 0
    %873 = vmatprep.subr.bf16.mxu0 0
    %874 = vmatpush1.bf16.msra.mxu0 0
    %875 = vmatprep.subr.bf16.mxu0 0
    %876 = vmatpush1.bf16.msra.mxu0 0
    %877 = vmatprep.subr.bf16.mxu0 0
    %878 = vmatpush1.bf16.msra.mxu0 0
    %879 = vmatprep.subr.bf16.mxu0 0
    %880 = vmatpush1.bf16.msra.mxu0 0
    %881 = vmatprep.subr.bf16.mxu0 0
    %882 = vmatpush1.bf16.msra.mxu0 0
    %883 = vmatprep.subr.bf16.mxu0 0
    %884 = vmatpush1.bf16.msra.mxu0 0
    %885 = vmatprep.mubr.bf16.mxu0 0
    %886 = vmatmul.mubr.bf16.gmra.mrb[0].mxu0 %v848
    %v887 = vpop.f32.mrb[0].mxu0
    %v888 = vadd.f32 0.0, %v887
    %v889 = vpop.f32.mrb[0].mxu0
    %v890 = vpop.f32.mrb[0].mxu0
    %v891 = vpop.f32.mrb[0].mxu0
    %892 = vdwg.mxu0
    %v893 = vpack.c.bf16 %v888, %v888
    %894 = vrot.lane.b32.xlu0 %v783, 104
    %v895 = vpop.permute.xlu0 %894
    %896 = vrot.lane.b32.xlu0 %v783, 96
    %v897 = vpop.permute.xlu0 %896
    %v899 = vsel %vm147, %v895, 0
    %v902 = vsel %vm147, %v897, 0
    %904 = vmatprep.subr.bf16.mxu0 0
    %905 = vmatpush1.bf16.xpose.msra.mxu0 %v902
    %906 = vmatprep.subr.bf16.mxu0 0
    %907 = vmatpush1.bf16.xpose.msra.mxu0 0
    %908 = vmatprep.subr.bf16.mxu0 0
    %909 = vmatpush1.bf16.xpose.msra.mxu0 0
    %910 = vmatprep.subr.bf16.mxu0 0
    %911 = vmatpush1.bf16.xpose.msra.mxu0 0
    %912 = vmatprep.subr.bf16.mxu0 0
    %913 = vmatpush1.bf16.xpose.msra.mxu0 0
    %914 = vmatprep.subr.bf16.mxu0 0
    %915 = vmatpush1.bf16.xpose.msra.mxu0 0
    %916 = vmatprep.subr.bf16.mxu0 0
    %917 = vmatpush1.bf16.xpose.msra.mxu0 0
    %918 = vmatprep.subr.bf16.mxu0 0
    %919 = vmatpush1.bf16.xpose.msra.mxu0 0
    %920 = vmatprep.subr.bf16.mxu0 0
    %921 = vmatpush1.bf16.xpose.msra.mxu0 0
    %922 = vmatprep.subr.bf16.mxu0 0
    %923 = vmatpush1.bf16.xpose.msra.mxu0 0
    %924 = vmatprep.subr.bf16.mxu0 0
    %925 = vmatpush1.bf16.xpose.msra.mxu0 0
    %926 = vmatprep.subr.bf16.mxu0 0
    %927 = vmatpush1.bf16.xpose.msra.mxu0 0
    %928 = vmatprep.subr.bf16.mxu0 0
    %929 = vmatpush1.bf16.xpose.msra.mxu0 0
    %930 = vmatprep.subr.bf16.mxu0 0
    %931 = vmatpush1.bf16.xpose.msra.mxu0 0
    %932 = vmatprep.subr.bf16.mxu0 0
    %933 = vmatpush1.bf16.xpose.msra.mxu0 0
    %934 = vmatprep.subr.bf16.mxu0 0
    %935 = vmatpush1.bf16.xpose.msra.mxu0 0
    %936 = vmatprep.mubr.bf16.mxu0 0
    %937 = vmatmul.mubr.bf16.gmra.mrb[0].mxu0 %v899
    %v938 = vpop.f32.mrb[0].mxu0
    %v939 = vadd.f32 0.0, %v938
    %v940 = vpop.f32.mrb[0].mxu0
    %v941 = vpop.f32.mrb[0].mxu0
    %v942 = vpop.f32.mrb[0].mxu0
    %943 = vdwg.mxu0
    %v944 = vsel %vm147, %v939, -inf
    %945 = vmax.xlane.f32.xlu0 %v944
    %v946 = vpop.xlane.xlu0 %945
    %v947 = vsub.f32 %v939, %v946
    %v948 = vmul.f32 %v947, 1.442695
    %v949 = vpow.pop %v948
    %v950 = vsel %vm147, %v949, 0.0
    %951 = vadd.xlane.f32.xlu0 %v950
    %v952 = vpop.xlane.xlu0 %951
    %v953 = vrcp.pop %v952
    %v954 = vmul.f32 %v949, %v953
    %v955 = vpack.c.bf16 %v954, %v954
    %956 = vrot.lane.b32.xlu0 %v783, 88
    %v957 = vpop.permute.xlu0 %956
    %v959 = vsel %vm147, %v955, 0
    %v962 = vsel %vm211, %v957, 0
    %964 = vmatprep.subr.bf16.mxu0 0
    %965 = vmatpush1.bf16.msra.mxu0 %v962
    %966 = vmatprep.subr.bf16.mxu0 0
    %967 = vmatpush1.bf16.msra.mxu0 0
    %968 = vmatprep.subr.bf16.mxu0 0
    %969 = vmatpush1.bf16.msra.mxu0 0
    %970 = vmatprep.subr.bf16.mxu0 0
    %971 = vmatpush1.bf16.msra.mxu0 0
    %972 = vmatprep.subr.bf16.mxu0 0
    %973 = vmatpush1.bf16.msra.mxu0 0
    %974 = vmatprep.subr.bf16.mxu0 0
    %975 = vmatpush1.bf16.msra.mxu0 0
    %976 = vmatprep.subr.bf16.mxu0 0
    %977 = vmatpush1.bf16.msra.mxu0 0
    %978 = vmatprep.subr.bf16.mxu0 0
    %979 = vmatpush1.bf16.msra.mxu0 0
    %980 = vmatprep.subr.bf16.mxu0 0
    %981 = vmatpush1.bf16.msra.mxu0 0
    %982 = vmatprep.subr.bf16.mxu0 0
    %983 = vmatpush1.bf16.msra.mxu0 0
    %984 = vmatprep.subr.bf16.mxu0 0
    %985 = vmatpush1.bf16.msra.mxu0 0
    %986 = vmatprep.subr.bf16.mxu0 0
    %987 = vmatpush1.bf16.msra.mxu0 0
    %988 = vmatprep.subr.bf16.mxu0 0
    %989 = vmatpush1.bf16.msra.mxu0 0
    %990 = vmatprep.subr.bf16.mxu0 0
    %991 = vmatpush1.bf16.msra.mxu0 0
    %992 = vmatprep.subr.bf16.mxu0 0
    %993 = vmatpush1.bf16.msra.mxu0 0
    %994 = vmatprep.subr.bf16.mxu0 0
    %995 = vmatpush1.bf16.msra.mxu0 0
    %996 = vmatprep.mubr.bf16.mxu0 0
    %997 = vmatmul.mubr.bf16.gmra.mrb[0].mxu0 %v959
    %v998 = vpop.f32.mrb[0].mxu0
    %v999 = vadd.f32 0.0, %v998
    %v1000 = vpop.f32.mrb[0].mxu0
    %v1001 = vpop.f32.mrb[0].mxu0
    %v1002 = vpop.f32.mrb[0].mxu0
    %1003 = vdwg.mxu0
    %v1004 = vpack.c.bf16 %v999, %v999
    %v1006 = vsel %vm147, %v1004, 0
    %1008 = vmatprep.subr.bf16.mxu0 0
    %1009 = vmatpush1.bf16.msra.mxu0 %v371
    %1010 = vmatprep.subr.bf16.mxu0 0
    %1011 = vmatpush1.bf16.msra.mxu0 0
    %1012 = vmatprep.subr.bf16.mxu0 0
    %1013 = vmatpush1.bf16.msra.mxu0 0
    %1014 = vmatprep.subr.bf16.mxu0 0
    %1015 = vmatpush1.bf16.msra.mxu0 0
    %1016 = vmatprep.subr.bf16.mxu0 0
    %1017 = vmatpush1.bf16.msra.mxu0 0
    %1018 = vmatprep.subr.bf16.mxu0 0
    %1019 = vmatpush1.bf16.msra.mxu0 0
    %1020 = vmatprep.subr.bf16.mxu0 0
    %1021 = vmatpush1.bf16.msra.mxu0 0
    %1022 = vmatprep.subr.bf16.mxu0 0
    %1023 = vmatpush1.bf16.msra.mxu0 0
    %1024 = vmatprep.subr.bf16.mxu0 0
    %1025 = vmatpush1.bf16.msra.mxu0 0
    %1026 = vmatprep.subr.bf16.mxu0 0
    %1027 = vmatpush1.bf16.msra.mxu0 0
    %1028 = vmatprep.subr.bf16.mxu0 0
    %1029 = vmatpush1.bf16.msra.mxu0 0
    %1030 = vmatprep.subr.bf16.mxu0 0
    %1031 = vmatpush1.bf16.msra.mxu0 0
    %1032 = vmatprep.subr.bf16.mxu0 0
    %1033 = vmatpush1.bf16.msra.mxu0 0
    %1034 = vmatprep.subr.bf16.mxu0 0
    %1035 = vmatpush1.bf16.msra.mxu0 0
    %1036 = vmatprep.subr.bf16.mxu0 0
    %1037 = vmatpush1.bf16.msra.mxu0 0
    %1038 = vmatprep.subr.bf16.mxu0 0
    %1039 = vmatpush1.bf16.msra.mxu0 0
    %1040 = vmatprep.mubr.bf16.mxu0 0
    %1041 = vmatmul.mubr.bf16.gmra.mrb[0].mxu0 %v1006
    %v1042 = vpop.f32.mrb[0].mxu0
    %v1043 = vadd.f32 0.0, %v1042
    %v1044 = vpop.f32.mrb[0].mxu0
    %v1045 = vpop.f32.mrb[0].mxu0
    %v1046 = vpop.f32.mrb[0].mxu0
    %1047 = vdwg.mxu0
    %v1049 = vsel %vm147, %v893, 0
    %1051 = vmatprep.subr.bf16.mxu0 0
    %1052 = vmatpush1.bf16.msra.mxu0 %v417
    %1053 = vmatprep.subr.bf16.mxu0 0
    %1054 = vmatpush1.bf16.msra.mxu0 0
    %1055 = vmatprep.subr.bf16.mxu0 0
    %1056 = vmatpush1.bf16.msra.mxu0 0
    %1057 = vmatprep.subr.bf16.mxu0 0
    %1058 = vmatpush1.bf16.msra.mxu0 0
    %1059 = vmatprep.subr.bf16.mxu0 0
    %1060 = vmatpush1.bf16.msra.mxu0 0
    %1061 = vmatprep.subr.bf16.mxu0 0
    %1062 = vmatpush1.bf16.msra.mxu0 0
    %1063 = vmatprep.subr.bf16.mxu0 0
    %1064 = vmatpush1.bf16.msra.mxu0 0
    %1065 = vmatprep.subr.bf16.mxu0 0
    %1066 = vmatpush1.bf16.msra.mxu0 0
    %1067 = vmatprep.subr.bf16.mxu0 0
    %1068 = vmatpush1.bf16.msra.mxu0 0
    %1069 = vmatprep.subr.bf16.mxu0 0
    %1070 = vmatpush1.bf16.msra.mxu0 0
    %1071 = vmatprep.subr.bf16.mxu0 0
    %1072 = vmatpush1.bf16.msra.mxu0 0
    %1073 = vmatprep.subr.bf16.mxu0 0
    %1074 = vmatpush1.bf16.msra.mxu0 0
    %1075 = vmatprep.subr.bf16.mxu0 0
    %1076 = vmatpush1.bf16.msra.mxu0 0
    %1077 = vmatprep.subr.bf16.mxu0 0
    %1078 = vmatpush1.bf16.msra.mxu0 0
    %1079 = vmatprep.subr.bf16.mxu0 0
    %1080 = vmatpush1.bf16.msra.mxu0 0
    %1081 = vmatprep.subr.bf16.mxu0 0
    %1082 = vmatpush1.bf16.msra.mxu0 0
    %1083 = vmatprep.mubr.bf16.mxu0 0
    %1084 = vmatmul.mubr.bf16.gmra.mrb[0].mxu0 %v1049
    %v1085 = vpop.f32.mrb[0].mxu0
    %v1086 = vadd.f32 %v1043, %v1085
    %v1087 = vpop.f32.mrb[0].mxu0
    %v1088 = vpop.f32.mrb[0].mxu0
    %v1089 = vpop.f32.mrb[0].mxu0
    %1090 = vdwg.mxu0
    %1091 = vrot.lane.b32.xlu0 %v783, 80
    %v1092 = vpop.permute.xlu0 %1091
    %1093 = vrot.lane.b32.xlu0 %v783, 72
    %v1094 = vpop.permute.xlu0 %1093
    %v1096 = vsel %vm147, %v1092, 0
    %v1099 = vsel %vm147, %v1094, 0
    %1101 = vmatprep.subr.bf16.mxu0 0
    %1102 = vmatpush1.bf16.xpose.msra.mxu0 %v1099
    %1103 = vmatprep.subr.bf16.mxu0 0
    %1104 = vmatpush1.bf16.xpose.msra.mxu0 0
    %1105 = vmatprep.subr.bf16.mxu0 0
    %1106 = vmatpush1.bf16.xpose.msra.mxu0 0
    %1107 = vmatprep.subr.bf16.mxu0 0
    %1108 = vmatpush1.bf16.xpose.msra.mxu0 0
    %1109 = vmatprep.subr.bf16.mxu0 0
    %1110 = vmatpush1.bf16.xpose.msra.mxu0 0
    %1111 = vmatprep.subr.bf16.mxu0 0
    %1112 = vmatpush1.bf16.xpose.msra.mxu0 0
    %1113 = vmatprep.subr.bf16.mxu0 0
    %1114 = vmatpush1.bf16.xpose.msra.mxu0 0
    %1115 = vmatprep.subr.bf16.mxu0 0
    %1116 = vmatpush1.bf16.xpose.msra.mxu0 0
    %1117 = vmatprep.subr.bf16.mxu0 0
    %1118 = vmatpush1.bf16.xpose.msra.mxu0 0
    %1119 = vmatprep.subr.bf16.mxu0 0
    %1120 = vmatpush1.bf16.xpose.msra.mxu0 0
    %1121 = vmatprep.subr.bf16.mxu0 0
    %1122 = vmatpush1.bf16.xpose.msra.mxu0 0
    %1123 = vmatprep.subr.bf16.mxu0 0
    %1124 = vmatpush1.bf16.xpose.msra.mxu0 0
    %1125 = vmatprep.subr.bf16.mxu0 0
    %1126 = vmatpush1.bf16.xpose.msra.mxu0 0
    %1127 = vmatprep.subr.bf16.mxu0 0
    %1128 = vmatpush1.bf16.xpose.msra.mxu0 0
    %1129 = vmatprep.subr.bf16.mxu0 0
    %1130 = vmatpush1.bf16.xpose.msra.mxu0 0
    %1131 = vmatprep.subr.bf16.mxu0 0
    %1132 = vmatpush1.bf16.xpose.msra.mxu0 0
    %1133 = vmatprep.mubr.bf16.mxu0 0
    %1134 = vmatmul.mubr.bf16.gmra.mrb[0].mxu0 %v1096
    %v1135 = vpop.f32.mrb[0].mxu0
    %v1136 = vadd.f32 0.0, %v1135
    %v1137 = vpop.f32.mrb[0].mxu0
    %v1138 = vpop.f32.mrb[0].mxu0
    %v1139 = vpop.f32.mrb[0].mxu0
    %1140 = vdwg.mxu0
    %v1141 = vsel %vm147, %v1136, -inf
    %1142 = vmax.xlane.f32.xlu0 %v1141
    %v1143 = vpop.xlane.xlu0 %1142
    %v1144 = vsub.f32 %v1136, %v1143
    %v1145 = vmul.f32 %v1144, 1.442695
    %v1146 = vpow.pop %v1145
    %v1147 = vsel %vm147, %v1146, 0.0
    %1148 = vadd.xlane.f32.xlu0 %v1147
    %v1149 = vpop.xlane.xlu0 %1148
    %v1150 = vrcp.pop %v1149
    %v1151 = vmul.f32 %v1146, %v1150
    %v1152 = vpack.c.bf16 %v1151, %v1151
    %1153 = vrot.lane.b32.xlu0 %v783, 64
    %v1154 = vpop.permute.xlu0 %1153
    %v1156 = vsel %vm147, %v1152, 0
    %v1159 = vsel %vm211, %v1154, 0
    %1161 = vmatprep.subr.bf16.mxu0 0
    %1162 = vmatpush1.bf16.msra.mxu0 %v1159
    %1163 = vmatprep.subr.bf16.mxu0 0
    %1164 = vmatpush1.bf16.msra.mxu0 0
    %1165 = vmatprep.subr.bf16.mxu0 0
    %1166 = vmatpush1.bf16.msra.mxu0 0
    %1167 = vmatprep.subr.bf16.mxu0 0
    %1168 = vmatpush1.bf16.msra.mxu0 0
    %1169 = vmatprep.subr.bf16.mxu0 0
    %1170 = vmatpush1.bf16.msra.mxu0 0
    %1171 = vmatprep.subr.bf16.mxu0 0
    %1172 = vmatpush1.bf16.msra.mxu0 0
    %1173 = vmatprep.subr.bf16.mxu0 0
    %1174 = vmatpush1.bf16.msra.mxu0 0
    %1175 = vmatprep.subr.bf16.mxu0 0
    %1176 = vmatpush1.bf16.msra.mxu0 0
    %1177 = vmatprep.subr.bf16.mxu0 0
    %1178 = vmatpush1.bf16.msra.mxu0 0
    %1179 = vmatprep.subr.bf16.mxu0 0
    %1180 = vmatpush1.bf16.msra.mxu0 0
    %1181 = vmatprep.subr.bf16.mxu0 0
    %1182 = vmatpush1.bf16.msra.mxu0 0
    %1183 = vmatprep.subr.bf16.mxu0 0
    %1184 = vmatpush1.bf16.msra.mxu0 0
    %1185 = vmatprep.subr.bf16.mxu0 0
    %1186 = vmatpush1.bf16.msra.mxu0 0
    %1187 = vmatprep.subr.bf16.mxu0 0
    %1188 = vmatpush1.bf16.msra.mxu0 0
    %1189 = vmatprep.subr.bf16.mxu0 0
    %1190 = vmatpush1.bf16.msra.mxu0 0
    %1191 = vmatprep.subr.bf16.mxu0 0
    %1192 = vmatpush1.bf16.msra.mxu0 0
    %1193 = vmatprep.mubr.bf16.mxu0 0
    %1194 = vmatmul.mubr.bf16.gmra.mrb[0].mxu0 %v1156
    %v1195 = vpop.f32.mrb[0].mxu0
    %v1196 = vadd.f32 0.0, %v1195
    %v1197 = vpop.f32.mrb[0].mxu0
    %v1198 = vpop.f32.mrb[0].mxu0
    %v1199 = vpop.f32.mrb[0].mxu0
    %1200 = vdwg.mxu0
    %v1201 = vpack.c.bf16 %v1196, %v1196
    %v1203 = vsel %vm147, %v1201, 0
    %1205 = vmatprep.subr.bf16.mxu0 0
    %1206 = vmatpush1.bf16.msra.mxu0 %v574
    %1207 = vmatprep.subr.bf16.mxu0 0
    %1208 = vmatpush1.bf16.msra.mxu0 0
    %1209 = vmatprep.subr.bf16.mxu0 0
    %1210 = vmatpush1.bf16.msra.mxu0 0
    %1211 = vmatprep.subr.bf16.mxu0 0
    %1212 = vmatpush1.bf16.msra.mxu0 0
    %1213 = vmatprep.subr.bf16.mxu0 0
    %1214 = vmatpush1.bf16.msra.mxu0 0
    %1215 = vmatprep.subr.bf16.mxu0 0
    %1216 = vmatpush1.bf16.msra.mxu0 0
    %1217 = vmatprep.subr.bf16.mxu0 0
    %1218 = vmatpush1.bf16.msra.mxu0 0
    %1219 = vmatprep.subr.bf16.mxu0 0
    %1220 = vmatpush1.bf16.msra.mxu0 0
    %1221 = vmatprep.subr.bf16.mxu0 0
    %1222 = vmatpush1.bf16.msra.mxu0 0
    %1223 = vmatprep.subr.bf16.mxu0 0
    %1224 = vmatpush1.bf16.msra.mxu0 0
    %1225 = vmatprep.subr.bf16.mxu0 0
    %1226 = vmatpush1.bf16.msra.mxu0 0
    %1227 = vmatprep.subr.bf16.mxu0 0
    %1228 = vmatpush1.bf16.msra.mxu0 0
    %1229 = vmatprep.subr.bf16.mxu0 0
    %1230 = vmatpush1.bf16.msra.mxu0 0
    %1231 = vmatprep.subr.bf16.mxu0 0
    %1232 = vmatpush1.bf16.msra.mxu0 0
    %1233 = vmatprep.subr.bf16.mxu0 0
    %1234 = vmatpush1.bf16.msra.mxu0 0
    %1235 = vmatprep.subr.bf16.mxu0 0
    %1236 = vmatpush1.bf16.msra.mxu0 0
    %1237 = vmatprep.mubr.bf16.mxu0 0
    %1238 = vmatmul.mubr.bf16.gmra.mrb[0].mxu0 %v1203
    %v1239 = vpop.f32.mrb[0].mxu0
    %v1240 = vadd.f32 0.0, %v1239
    %v1241 = vpop.f32.mrb[0].mxu0
    %v1242 = vpop.f32.mrb[0].mxu0
    %v1243 = vpop.f32.mrb[0].mxu0
    %1244 = vdwg.mxu0
    %v1245 = vadd.f32 %v1086, %v1240
    %1246 = vrot.lane.b32.xlu0 %v783, 56
    %v1247 = vpop.permute.xlu0 %1246
    %1248 = vrot.lane.b32.xlu0 %v783, 48
    %v1249 = vpop.permute.xlu0 %1248
    %v1251 = vsel %vm147, %v1247, 0
    %v1254 = vsel %vm147, %v1249, 0
    %1256 = vmatprep.subr.bf16.mxu0 0
    %1257 = vmatpush1.bf16.xpose.msra.mxu0 %v1254
    %1258 = vmatprep.subr.bf16.mxu0 0
    %1259 = vmatpush1.bf16.xpose.msra.mxu0 0
    %1260 = vmatprep.subr.bf16.mxu0 0
    %1261 = vmatpush1.bf16.xpose.msra.mxu0 0
    %1262 = vmatprep.subr.bf16.mxu0 0
    %1263 = vmatpush1.bf16.xpose.msra.mxu0 0
    %1264 = vmatprep.subr.bf16.mxu0 0
    %1265 = vmatpush1.bf16.xpose.msra.mxu0 0
    %1266 = vmatprep.subr.bf16.mxu0 0
    %1267 = vmatpush1.bf16.xpose.msra.mxu0 0
    %1268 = vmatprep.subr.bf16.mxu0 0
    %1269 = vmatpush1.bf16.xpose.msra.mxu0 0
    %1270 = vmatprep.subr.bf16.mxu0 0
    %1271 = vmatpush1.bf16.xpose.msra.mxu0 0
    %1272 = vmatprep.subr.bf16.mxu0 0
    %1273 = vmatpush1.bf16.xpose.msra.mxu0 0
    %1274 = vmatprep.subr.bf16.mxu0 0
    %1275 = vmatpush1.bf16.xpose.msra.mxu0 0
    %1276 = vmatprep.subr.bf16.mxu0 0
    %1277 = vmatpush1.bf16.xpose.msra.mxu0 0
    %1278 = vmatprep.subr.bf16.mxu0 0
    %1279 = vmatpush1.bf16.xpose.msra.mxu0 0
    %1280 = vmatprep.subr.bf16.mxu0 0
    %1281 = vmatpush1.bf16.xpose.msra.mxu0 0
    %1282 = vmatprep.subr.bf16.mxu0 0
    %1283 = vmatpush1.bf16.xpose.msra.mxu0 0
    %1284 = vmatprep.subr.bf16.mxu0 0
    %1285 = vmatpush1.bf16.xpose.msra.mxu0 0
    %1286 = vmatprep.subr.bf16.mxu0 0
    %1287 = vmatpush1.bf16.xpose.msra.mxu0 0
    %1288 = vmatprep.mubr.bf16.mxu0 0
    %1289 = vmatmul.mubr.bf16.gmra.mrb[0].mxu0 %v1251
    %v1290 = vpop.f32.mrb[0].mxu0
    %v1291 = vadd.f32 0.0, %v1290
    %v1292 = vpop.f32.mrb[0].mxu0
    %v1293 = vpop.f32.mrb[0].mxu0
    %v1294 = vpop.f32.mrb[0].mxu0
    %1295 = vdwg.mxu0
    %v1296 = vsel %vm147, %v1291, -inf
    %1297 = vmax.xlane.f32.xlu0 %v1296
    %v1298 = vpop.xlane.xlu0 %1297
    %v1299 = vsub.f32 %v1291, %v1298
    %v1300 = vmul.f32 %v1299, 1.442695
    %v1301 = vpow.pop %v1300
    %v1302 = vsel %vm147, %v1301, 0.0
    %1303 = vadd.xlane.f32.xlu0 %v1302
    %v1304 = vpop.xlane.xlu0 %1303
    %v1305 = vrcp.pop %v1304
    %v1306 = vmul.f32 %v1301, %v1305
    %v1307 = vpack.c.bf16 %v1306, %v1306
    %1308 = vrot.lane.b32.xlu0 %v783, 40
    %v1309 = vpop.permute.xlu0 %1308
    %v1311 = vsel %vm147, %v1307, 0
    %v1314 = vsel %vm211, %v1309, 0
    %1316 = vmatprep.subr.bf16.mxu0 0
    %1317 = vmatpush1.bf16.msra.mxu0 %v1314
    %1318 = vmatprep.subr.bf16.mxu0 0
    %1319 = vmatpush1.bf16.msra.mxu0 0
    %1320 = vmatprep.subr.bf16.mxu0 0
    %1321 = vmatpush1.bf16.msra.mxu0 0
    %1322 = vmatprep.subr.bf16.mxu0 0
    %1323 = vmatpush1.bf16.msra.mxu0 0
    %1324 = vmatprep.subr.bf16.mxu0 0
    %1325 = vmatpush1.bf16.msra.mxu0 0
    %1326 = vmatprep.subr.bf16.mxu0 0
    %1327 = vmatpush1.bf16.msra.mxu0 0
    %1328 = vmatprep.subr.bf16.mxu0 0
    %1329 = vmatpush1.bf16.msra.mxu0 0
    %1330 = vmatprep.subr.bf16.mxu0 0
    %1331 = vmatpush1.bf16.msra.mxu0 0
    %1332 = vmatprep.subr.bf16.mxu0 0
    %1333 = vmatpush1.bf16.msra.mxu0 0
    %1334 = vmatprep.subr.bf16.mxu0 0
    %1335 = vmatpush1.bf16.msra.mxu0 0
    %1336 = vmatprep.subr.bf16.mxu0 0
    %1337 = vmatpush1.bf16.msra.mxu0 0
    %1338 = vmatprep.subr.bf16.mxu0 0
    %1339 = vmatpush1.bf16.msra.mxu0 0
    %1340 = vmatprep.subr.bf16.mxu0 0
    %1341 = vmatpush1.bf16.msra.mxu0 0
    %1342 = vmatprep.subr.bf16.mxu0 0
    %1343 = vmatpush1.bf16.msra.mxu0 0
    %1344 = vmatprep.subr.bf16.mxu0 0
    %1345 = vmatpush1.bf16.msra.mxu0 0
    %1346 = vmatprep.subr.bf16.mxu0 0
    %1347 = vmatpush1.bf16.msra.mxu0 0
    %1348 = vmatprep.mubr.bf16.mxu0 0
    %1349 = vmatmul.mubr.bf16.gmra.mrb[0].mxu0 %v1311
    %v1350 = vpop.f32.mrb[0].mxu0
    %v1351 = vadd.f32 0.0, %v1350
    %v1352 = vpop.f32.mrb[0].mxu0
    %v1353 = vpop.f32.mrb[0].mxu0
    %v1354 = vpop.f32.mrb[0].mxu0
    %1355 = vdwg.mxu0
    %v1356 = vpack.c.bf16 %v1351, %v1351
    %v1358 = vsel %vm147, %v1356, 0
    %1360 = vmatprep.subr.bf16.mxu0 0
    %1361 = vmatpush1.bf16.msra.mxu0 %v732
    %1362 = vmatprep.subr.bf16.mxu0 0
    %1363 = vmatpush1.bf16.msra.mxu0 0
    %1364 = vmatprep.subr.bf16.mxu0 0
    %1365 = vmatpush1.bf16.msra.mxu0 0
    %1366 = vmatprep.subr.bf16.mxu0 0
    %1367 = vmatpush1.bf16.msra.mxu0 0
    %1368 = vmatprep.subr.bf16.mxu0 0
    %1369 = vmatpush1.bf16.msra.mxu0 0
    %1370 = vmatprep.subr.bf16.mxu0 0
    %1371 = vmatpush1.bf16.msra.mxu0 0
    %1372 = vmatprep.subr.bf16.mxu0 0
    %1373 = vmatpush1.bf16.msra.mxu0 0
    %1374 = vmatprep.subr.bf16.mxu0 0
    %1375 = vmatpush1.bf16.msra.mxu0 0
    %1376 = vmatprep.subr.bf16.mxu0 0
    %1377 = vmatpush1.bf16.msra.mxu0 0
    %1378 = vmatprep.subr.bf16.mxu0 0
    %1379 = vmatpush1.bf16.msra.mxu0 0
    %1380 = vmatprep.subr.bf16.mxu0 0
    %1381 = vmatpush1.bf16.msra.mxu0 0
    %1382 = vmatprep.subr.bf16.mxu0 0
    %1383 = vmatpush1.bf16.msra.mxu0 0
    %1384 = vmatprep.subr.bf16.mxu0 0
    %1385 = vmatpush1.bf16.msra.mxu0 0
    %1386 = vmatprep.subr.bf16.mxu0 0
    %1387 = vmatpush1.bf16.msra.mxu0 0
    %1388 = vmatprep.subr.bf16.mxu0 0
    %1389 = vmatpush1.bf16.msra.mxu0 0
    %1390 = vmatprep.subr.bf16.mxu0 0
    %1391 = vmatpush1.bf16.msra.mxu0 0
    %1392 = vmatprep.mubr.bf16.mxu0 0
    %1393 = vmatmul.mubr.bf16.gmra.mrb[0].mxu0 %v1358
    %v1394 = vpop.f32.mrb[0].mxu0
    %v1395 = vadd.f32 0.0, %v1394
    %v1396 = vpop.f32.mrb[0].mxu0
    %v1397 = vpop.f32.mrb[0].mxu0
    %v1398 = vpop.f32.mrb[0].mxu0
    %1399 = vdwg.mxu0
    %v1400 = vadd.f32 %v1245, %v1395
    %v1401 = vadd.f32 %v1400, %v779
    %1402 = vst.msk [vmem:[#allocation8 + $0x8] sm:$0xff] %vm98, %v1401
    // Predicated region
    $region34: #{tpu_custom_call.1} parent=1 // pred_check
      _
    $region35: #{tpu_custom_call.1} parent=1 // pred_check_branch
      %1404 = sbr.rel (0) target = $region37
    $region36: #{tpu_custom_call.1} parent=1 // pred_region
      %s1406 = ssub.s32 256, 256
      %1407 = vsyncadd [#allocation4], %s1406
      %s1408 = sshll.u32 [#allocation8], 4
      %s1409 = int_to_ptr.vmem [resolvable:$true] %s1408
      %1414 = dma.vmem_to_hbm [thread:$0]  %s1409, 256, %s5, [#allocation4], 128, 128, 8
    $region37: #{tpu_custom_call.1} parent=1 // pred_fallthru
      _
    // Predicated region
    $region38: #{tpu_custom_call.1} parent=1 // pred_check
      _
    $region39: #{tpu_custom_call.1} parent=1 // pred_check_branch
      %1416 = sbr.rel (0) target = $region41
    $region40: #{tpu_custom_call.1} parent=1 // pred_region
      %1417 = dma.done [#allocation4], 256
    $region41: #{tpu_custom_call.1} parent=1 // pred_fallthru
      _
    %1418 = vsyncpa [#allocation3], 1
    %1419 = vsyncpa [#allocation6], 1
    %1420 = vsyncpa [#allocation4], 1

</llo_original>
